<compile_context>
chip_gen: v7x
topology: tpu7x:2x2x1
jax: 0.10.0
libtpu: 0.0.40
codegen_flags: <defaults>
</compile_context>

<pallas_src>
import math

import jax
import jax.numpy as jnp
import numpy as np
from jax import lax
from jax.experimental import pallas as pl
from jax.experimental.pallas import tpu as pltpu


# ----------------------------- kernel helpers ------------------------------

def _normalize_f32(x, eps=1e-5):
    # LayerNorm core (PyTorch nn.LayerNorm: biased variance, eps inside sqrt).
    # The affine (gamma/beta) is folded into the following matmul on the host.
    mean = jnp.mean(x, axis=-1, keepdims=True)
    var = jnp.mean(jnp.square(x - mean), axis=-1, keepdims=True)
    return (x - mean) * lax.rsqrt(var + eps)


def _gelu_exact(x):
    # PyTorch nn.GELU() default (approximate='none'): 0.5*x*(1+erf(x/sqrt(2)))
    return 0.5 * x * (1.0 + lax.erf(x * (1.0 / math.sqrt(2.0))))


# ------------------------------- the kernel --------------------------------

def self_attention_kernel(
        xq_ref, xkv_ref,
        wq_ref, bq_ref, wk_ref, bk_ref, wv_ref, bv_ref,
        wo_ref, bo_ref,
        w1_ref, b1_ref, w2_ref, b2_ref,
        o_ref,
        q_scr, m_scr, l_scr, acc_scr):
    # Grid: (batch, q-tile, kv-tile); kv-tile is the (innermost) reduction axis.
    H = wq_ref.shape[0]
    ki = pl.program_id(2)
    nk = pl.num_programs(2)

    # ---- per-(batch, q-tile) setup: LN core + Q projection + accumulators ----
    @pl.when(ki == 0)
    def _init():
        xq = xq_ref[0].astype(jnp.float32)                          # (tm, C)
        zq = _normalize_f32(xq)
        tm, C = zq.shape
        zq_b = jnp.broadcast_to(zq.astype(jnp.bfloat16)[None], (H, tm, C))
        # LN1 affine and 1/sqrt(d) already folded into wq/bq on the host.
        q = jnp.einsum('hqc,hcd->hqd', zq_b, wq_ref[...],
                       preferred_element_type=jnp.float32) + bq_ref[...]
        q_scr[...] = q.astype(jnp.bfloat16)                         # (H, tm, dqk)
        m_scr[...] = jnp.full(m_scr.shape, -jnp.inf, m_scr.dtype)
        l_scr[...] = jnp.zeros(l_scr.shape, l_scr.dtype)
        acc_scr[...] = jnp.zeros(acc_scr.shape, acc_scr.dtype)

    # ---- K/V tile: LN core + projections (heads batched), online-softmax ----
    xkv = xkv_ref[0].astype(jnp.float32)                            # (tk, C)
    zk = _normalize_f32(xkv)
    tk, C = zk.shape
    zk_b = jnp.broadcast_to(zk.astype(jnp.bfloat16)[None], (H, tk, C))
    k = jnp.einsum('hkc,hcd->hkd', zk_b, wk_ref[...],
                   preferred_element_type=jnp.float32) + bk_ref[...]
    v = jnp.einsum('hkc,hcd->hkd', zk_b, wv_ref[...],
                   preferred_element_type=jnp.float32) + bv_ref[...]
    kh = k.astype(jnp.bfloat16)                                     # (H, tk, dqk)
    vh = v.astype(jnp.bfloat16)                                     # (H, tk, dv)

    s = jnp.einsum('hqd,hkd->hqk', q_scr[...], kh,
                   preferred_element_type=jnp.float32)              # (H, tm, tk)
    # TODO(synk): optional attention_mask path (additive mask + masked_fill) is
    # not implemented; module default is attention_mask=None.

    m_prev = m_scr[...]                                             # (H, tm, 1)
    m_new = jnp.maximum(m_prev, jnp.max(s, axis=-1, keepdims=True))
    alpha = jnp.exp(m_prev - m_new)
    p = jnp.exp(s - m_new)                                          # (H, tm, tk) f32
    l_scr[...] = alpha * l_scr[...] + jnp.sum(p, axis=-1, keepdims=True)
    acc_scr[...] = alpha * acc_scr[...] + jnp.einsum(
        'hqk,hkd->hqd', p.astype(jnp.bfloat16), vh,
        preferred_element_type=jnp.float32)
    m_scr[...] = m_new

    # ---- last K/V tile: finish attention, Wo (folded per head), residual, FFN ----
    @pl.when(ki == nk - 1)
    def _finalize():
        inv_l = pl.reciprocal(l_scr[...], approx=True)              # EUP slot
        w_heads = (acc_scr[...] * inv_l).astype(jnp.bfloat16)       # (H, tm, dv)
        # sum_h (P_h V_h) @ Wo_h  -> (tm, C); no concat / head transposes.
        attn = jnp.sum(
            jnp.einsum('hqd,hdc->hqc', w_heads, wo_ref[...],
                       preferred_element_type=jnp.float32),
            axis=0) + bo_ref[0]

        x1 = xq_ref[0].astype(jnp.float32) + attn                   # residual 1
        z2 = _normalize_f32(x1)                                     # LN2 affine folded into w1/b1
        h1 = jnp.dot(z2.astype(jnp.bfloat16), w1_ref[...],
                     preferred_element_type=jnp.float32) + b1_ref[0]
        h1 = _gelu_exact(h1)
        ff = jnp.dot(h1.astype(jnp.bfloat16), w2_ref[...],
                     preferred_element_type=jnp.float32) + b2_ref[0]
        o_ref[0] = (x1 + ff).astype(o_ref.dtype)                    # residual 2


# ------------------------------ host wrapper --------------------------------

def _pick_tile(n, cap=256):
    for t in (256, 128, 64, 32, 16, 8):
        if t <= cap and t <= n and n % t == 0:
            return t
    return n


def self_attention_forward(x, params, *, num_heads, q_tile=None, kv_tile=None):
    B, M, C = x.shape
    QK = params["wq"].shape[1]
    V = params["wv"].shape[1]
    F = params["w1"].shape[1]
    H = num_heads
    dqk = QK // H
    dv = V // H
    scale = dqk ** -0.5

    tm = q_tile or _pick_tile(M)
    tk = kv_tile or _pick_tile(M)
    assert M % tm == 0 and M % tk == 0, "sequence length must divide the tiles"

    bf16, f32 = jnp.bfloat16, jnp.float32

    # ---- host-side weight preparation (f32 folds, then bf16 cast for MXU) ----
    g1 = params["ln1_g"][0].astype(f32)
    be1 = params["ln1_b"][0].astype(f32)
    g2 = params["ln2_g"][0].astype(f32)
    be2 = params["ln2_b"][0].astype(f32)

    # (z*g + b) @ W + bias  ==  z @ (g[:,None]*W) + (b @ W + bias)
    wq_f = (g1[:, None] * params["wq"].astype(f32)) * scale
    bq_f = (be1 @ params["wq"].astype(f32) + params["bq"][0].astype(f32)) * scale
    wk_f = g1[:, None] * params["wk"].astype(f32)
    bk_f = be1 @ params["wk"].astype(f32) + params["bk"][0].astype(f32)
    wv_f = g1[:, None] * params["wv"].astype(f32)
    bv_f = be1 @ params["wv"].astype(f32) + params["bv"][0].astype(f32)
    w1_f = g2[:, None] * params["w1"].astype(f32)
    b1_f = be2 @ params["w1"].astype(f32) + params["b1"][0].astype(f32)

    # Per-head (batched) layouts: (H, C, d) weights, (H, 1, d) biases.
    wq_h = wq_f.reshape(C, H, dqk).transpose(1, 0, 2).astype(bf16)
    wk_h = wk_f.reshape(C, H, dqk).transpose(1, 0, 2).astype(bf16)
    wv_h = wv_f.reshape(C, H, dv).transpose(1, 0, 2).astype(bf16)
    bq_h = bq_f.reshape(1, H, dqk).transpose(1, 0, 2)
    bk_h = bk_f.reshape(1, H, dqk).transpose(1, 0, 2)
    bv_h = bv_f.reshape(1, H, dv).transpose(1, 0, 2)
    wo_h = params["wo"].reshape(H, dv, C).astype(bf16)

    weights = [
        wq_h, bq_h, wk_h, bk_h, wv_h, bv_h,
        wo_h, params["bo"].astype(f32),
        w1_f.astype(bf16), b1_f.reshape(1, F),
        params["w2"].astype(bf16), params["b2"].astype(f32),
    ]

    def _const_spec(a):
        zeros = (0,) * a.ndim
        return pl.BlockSpec(a.shape, lambda b, qi, ki, _z=zeros: _z)

    grid = (B, M // tm, M // tk)
    in_specs = [
        pl.BlockSpec((1, tm, C), lambda b, qi, ki: (b, qi, 0)),   # x: query tile
        pl.BlockSpec((1, tk, C), lambda b, qi, ki: (b, ki, 0)),   # x: key/value tile
    ] + [_const_spec(w) for w in weights]

    # Advisory cost estimate for the XLA scheduler.
    flops = 2 * B * M * (C * (2 * QK + V) + M * (QK + V) + V * C + 2 * C * F)
    transcendentals = B * (H * M * M + M * F)
    bytes_accessed = (2 * B * M * C * x.dtype.itemsize
                      + sum(int(np.prod(w.shape)) * w.dtype.itemsize for w in weights))

    return pl.pallas_call(
        self_attention_kernel,
        out_shape=jax.ShapeDtypeStruct((B, M, C), x.dtype),
        grid=grid,
        in_specs=in_specs,
        out_specs=pl.BlockSpec((1, tm, C), lambda b, qi, ki: (b, qi, 0)),
        scratch_shapes=[
            pltpu.VMEM((H, tm, dqk), jnp.bfloat16),   # scaled Q (per head)
            pltpu.VMEM((H, tm, 1), jnp.float32),      # running max
            pltpu.VMEM((H, tm, 1), jnp.float32),      # running sum
            pltpu.VMEM((H, tm, dv), jnp.float32),     # PV accumulator
        ],
        compiler_params=pltpu.CompilerParams(
            dimension_semantics=("parallel", "parallel", "arbitrary"),
            vmem_limit_bytes=48 * 1024 * 1024),       # headroom below v7x's 64 MiB
        cost_estimate=pl.CostEstimate(
            flops=flops, transcendentals=transcendentals,
            bytes_accessed=bytes_accessed),
    )(x, x, *weights)


# --------------------------- pure-JAX reference ------------------------------

def self_attention_reference(x, params, *, num_heads):
    B, M, C = x.shape
    qk_out_dim = params["wq"].shape[1]
    v_out_dim = params["wv"].shape[1]
    dqk = qk_out_dim // num_heads
    dv = v_out_dim // num_heads

    def ln(y, g, b):
        mean = jnp.mean(y, axis=-1, keepdims=True)
        var = jnp.mean(jnp.square(y - mean), axis=-1, keepdims=True)
        return (y - mean) / jnp.sqrt(var + 1e-5) * g[0] + b[0]

    xn = ln(x, params["ln1_g"], params["ln1_b"])
    q = xn @ params["wq"] + params["bq"][0]
    k = xn @ params["wk"] + params["bk"][0]
    v = xn @ params["wv"] + params["bv"][0]

    def split(t, d):
        return jnp.swapaxes(t.reshape(B, M, num_heads, d), 1, 2)  # (B,H,M,d)

    qh, kh, vh = split(q, dqk), split(k, dqk), split(v, dv)
    s = jnp.einsum("bhqd,bhkd->bhqk", qh, kh) * (dqk ** -0.5)
    p = jax.nn.softmax(s, axis=-1)
    w = jnp.einsum("bhqk,bhkd->bhqd", p, vh)
    w = jnp.swapaxes(w, 1, 2).reshape(B, M, v_out_dim)
    attn = w @ params["wo"] + params["bo"][0]

    x1 = x + attn
    xn2 = ln(x1, params["ln2_g"], params["ln2_b"])
    h1 = xn2 @ params["w1"] + params["b1"][0]
    h1 = 0.5 * h1 * (1.0 + lax.erf(h1 / math.sqrt(2.0)))
    ff = h1 @ params["w2"] + params["b2"][0]
    return x1 + ff


# --------------------------------- main --------------------------------------

def init_params(key, hidden_dim, qk_out_dim, v_out_dim, widening_factor):
    hid = hidden_dim * widening_factor
    shapes = {
        "ln1_g": (1, hidden_dim), "ln1_b": (1, hidden_dim),
        "wq": (hidden_dim, qk_out_dim), "bq": (1, qk_out_dim),
        "wk": (hidden_dim, qk_out_dim), "bk": (1, qk_out_dim),
        "wv": (hidden_dim, v_out_dim), "bv": (1, v_out_dim),
        "wo": (v_out_dim, hidden_dim), "bo": (1, hidden_dim),
        "ln2_g": (1, hidden_dim), "ln2_b": (1, hidden_dim),
        "w1": (hidden_dim, hid), "b1": (1, hid),
        "w2": (hid, hidden_dim), "b2": (1, hidden_dim),
    }
    params = {}
    keys = jax.random.split(key, len(shapes))
    for k_, (name, shp) in zip(keys, shapes.items()):
        if name in ("ln1_g", "ln2_g"):
            base = jnp.ones(shp, jnp.float32)
        else:
            base = jnp.zeros(shp, jnp.float32)
        params[name] = base + 0.05 * jax.random.normal(k_, shp, jnp.float32)
    return params


if __name__ == "__main__":
    B, M, C = 2, 16, 32         # batch, sequence, hidden_dim
    num_heads = 2
    widening_factor = 4
    qk_out_dim = C              # module defaults (qk_out_dim=None -> q_dim)
    v_out_dim = C

    root = jax.random.PRNGKey(0)
    kx, kp = jax.random.split(root)
    x = jax.random.normal(kx, (B, M, C), jnp.float32)
    params = init_params(kp, C, qk_out_dim, v_out_dim, widening_factor)

    # Small tiles so the run exercises the multi-tile flash path (grid 2x2x2).
    out = self_attention_forward(x, params, num_heads=num_heads,
                                 q_tile=8, kv_tile=8)
    out = jax.block_until_ready(out)

    ref = self_attention_reference(x, params, num_heads=num_heads)
    # bf16 matmul operands (f32 accumulation / statistics) -> bf16-level tolerance.
    np.testing.assert_allclose(np.asarray(out), np.asarray(ref),
                               rtol=2e-2, atol=2e-2)

    print("KERNEL_OK")
</pallas_src>

<mosaic_0001>
module attributes {stable_mosaic.version = 11 : i64} {
  func.func @self_attention_kernel(%arg0: i32, %arg1: i32, %arg2: i32, %arg3: memref<1x8x32xf32, #tpu.memory_space<vmem>>, %arg4: memref<1x8x32xf32, #tpu.memory_space<vmem>>, %arg5: memref<2x32x16xbf16, #tpu.memory_space<vmem>>, %arg6: memref<2x1x16xf32, #tpu.memory_space<vmem>>, %arg7: memref<2x32x16xbf16, #tpu.memory_space<vmem>>, %arg8: memref<2x1x16xf32, #tpu.memory_space<vmem>>, %arg9: memref<2x32x16xbf16, #tpu.memory_space<vmem>>, %arg10: memref<2x1x16xf32, #tpu.memory_space<vmem>>, %arg11: memref<2x16x32xbf16, #tpu.memory_space<vmem>>, %arg12: memref<1x32xf32, #tpu.memory_space<vmem>>, %arg13: memref<32x128xbf16, #tpu.memory_space<vmem>>, %arg14: memref<1x128xf32, #tpu.memory_space<vmem>>, %arg15: memref<128x32xbf16, #tpu.memory_space<vmem>>, %arg16: memref<1x32xf32, #tpu.memory_space<vmem>>, %arg17: memref<1x8x32xf32, #tpu.memory_space<vmem>>, %arg18: memref<2x8x16xbf16, #tpu.memory_space<vmem>>, %arg19: memref<2x8x1xf32, #tpu.memory_space<vmem>>, %arg20: memref<2x8x1xf32, #tpu.memory_space<vmem>>, %arg21: memref<2x8x16xf32, #tpu.memory_space<vmem>>) attributes {dimension_semantics = [#tpu.dimension_semantics<parallel>, #tpu.dimension_semantics<parallel>, #tpu.dimension_semantics<arbitrary>], iteration_bounds = array<i64: 2, 2, 2>, scalar_prefetch = 0 : i64, scratch_operands = 4 : i64, tpu.core_type = #tpu.core_type<tc>, window_params = [{transform_indices = @transform_0, window_bounds = array<i64: 1, 8, 32>}, {transform_indices = @transform_1, window_bounds = array<i64: 1, 8, 32>}, {pipeline_mode = #tpu.pipeline_mode<synchronous>, transform_indices = @transform_2, window_bounds = array<i64: 2, 32, 16>}, {pipeline_mode = #tpu.pipeline_mode<synchronous>, transform_indices = @transform_3, window_bounds = array<i64: 2, 1, 16>}, {pipeline_mode = #tpu.pipeline_mode<synchronous>, transform_indices = @transform_4, window_bounds = array<i64: 2, 32, 16>}, {pipeline_mode = #tpu.pipeline_mode<synchronous>, transform_indices = @transform_5, window_bounds = array<i64: 2, 1, 16>}, {pipeline_mode = #tpu.pipeline_mode<synchronous>, transform_indices = @transform_6, window_bounds = array<i64: 2, 32, 16>}, {pipeline_mode = #tpu.pipeline_mode<synchronous>, transform_indices = @transform_7, window_bounds = array<i64: 2, 1, 16>}, {pipeline_mode = #tpu.pipeline_mode<synchronous>, transform_indices = @transform_8, window_bounds = array<i64: 2, 16, 32>}, {pipeline_mode = #tpu.pipeline_mode<synchronous>, transform_indices = @transform_9, window_bounds = array<i64: 1, 32>}, {pipeline_mode = #tpu.pipeline_mode<synchronous>, transform_indices = @transform_10, window_bounds = array<i64: 32, 128>}, {pipeline_mode = #tpu.pipeline_mode<synchronous>, transform_indices = @transform_11, window_bounds = array<i64: 1, 128>}, {pipeline_mode = #tpu.pipeline_mode<synchronous>, transform_indices = @transform_12, window_bounds = array<i64: 128, 32>}, {pipeline_mode = #tpu.pipeline_mode<synchronous>, transform_indices = @transform_13, window_bounds = array<i64: 1, 32>}, {transform_indices = @transform_14, window_bounds = array<i64: 1, 8, 32>}]} {
    %c0_i32 = arith.constant 0 : i32
    %0 = arith.cmpi eq, %arg2, %c0_i32 : i32
    %1 = arith.extui %0 : i1 to i32
    %c0_i32_0 = arith.constant 0 : i32
    %2 = arith.cmpi ne, %1, %c0_i32_0 : i32
    scf.if %2 {
      %c0_47 = arith.constant 0 : index
      %c0_48 = arith.constant 0 : index
      %c0_49 = arith.constant 0 : index
      %67 = vector.load %arg3[%c0_47, %c0_48, %c0_49] : memref<1x8x32xf32, #tpu.memory_space<vmem>>, vector<1x8x32xf32>
      %68 = vector.shape_cast %67 : vector<1x8x32xf32> to vector<8x32xf32>
      %cst_50 = arith.constant dense<0.000000e+00> : vector<8xf32>
      %69 = vector.multi_reduction <add>, %68, %cst_50 [1] : vector<8x32xf32> to vector<8xf32>
      %70 = vector.shape_cast %69 : vector<8xf32> to vector<8x1xf32>
      %cst_51 = arith.constant 3.200000e+01 : f32
      %71 = vector.broadcast %cst_51 : f32 to vector<8x1xf32>
      %72 = arith.divf %70, %71 : vector<8x1xf32>
      %73 = vector.broadcast %72 : vector<8x1xf32> to vector<8x32xf32>
      %74 = arith.subf %68, %73 : vector<8x32xf32>
      %75 = arith.mulf %74, %74 : vector<8x32xf32>
      %cst_52 = arith.constant dense<0.000000e+00> : vector<8xf32>
      %76 = vector.multi_reduction <add>, %75, %cst_52 [1] : vector<8x32xf32> to vector<8xf32>
      %77 = vector.shape_cast %76 : vector<8xf32> to vector<8x1xf32>
      %cst_53 = arith.constant 3.200000e+01 : f32
      %78 = vector.broadcast %cst_53 : f32 to vector<8x1xf32>
      %79 = arith.divf %77, %78 : vector<8x1xf32>
      %80 = vector.broadcast %72 : vector<8x1xf32> to vector<8x32xf32>
      %81 = arith.subf %68, %80 : vector<8x32xf32>
      %cst_54 = arith.constant 9.99999974E-6 : f32
      %82 = vector.broadcast %cst_54 : f32 to vector<8x1xf32>
      %83 = arith.addf %79, %82 : vector<8x1xf32>
      %84 = math.rsqrt %83 : vector<8x1xf32>
      %85 = vector.broadcast %84 : vector<8x1xf32> to vector<8x32xf32>
      %86 = arith.mulf %81, %85 : vector<8x32xf32>
      %87 = arith.truncf %86 : vector<8x32xf32> to vector<8x32xbf16>
      %88 = vector.shape_cast %87 : vector<8x32xbf16> to vector<1x8x32xbf16>
      %89 = vector.shape_cast %88 : vector<1x8x32xbf16> to vector<1x8x32xbf16>
      %90 = vector.broadcast %89 : vector<1x8x32xbf16> to vector<2x8x32xbf16>
      %c0_55 = arith.constant 0 : index
      %c0_56 = arith.constant 0 : index
      %c0_57 = arith.constant 0 : index
      %91 = vector.load %arg5[%c0_55, %c0_56, %c0_57] : memref<2x32x16xbf16, #tpu.memory_space<vmem>>, vector<2x32x16xbf16>
      "tpu.trace_start"() <{level = 10 : i32, message = "hqc,hcd->hqd"}> : () -> ()
      %cst_58 = arith.constant dense<0.000000e+00> : vector<2x8x16xf32>
      %92 = tpu.matmul %90, %91, %cst_58 {dimension_numbers = #tpu.dot_dimension_numbers<[2], [1], [1], [2], [0, 0, 0, 1, 1, 2], [0], [0]>} : vector<2x8x32xbf16>, vector<2x32x16xbf16>, vector<2x8x16xf32> -> vector<2x8x16xf32>
      "tpu.trace_stop"() : () -> ()
      %c0_59 = arith.constant 0 : index
      %c0_60 = arith.constant 0 : index
      %c0_61 = arith.constant 0 : index
      %93 = vector.load %arg6[%c0_59, %c0_60, %c0_61] : memref<2x1x16xf32, #tpu.memory_space<vmem>>, vector<2x1x16xf32>
      %94 = vector.broadcast %93 : vector<2x1x16xf32> to vector<2x8x16xf32>
      %95 = arith.addf %92, %94 : vector<2x8x16xf32>
      %96 = arith.truncf %95 : vector<2x8x16xf32> to vector<2x8x16xbf16>
      %c0_62 = arith.constant 0 : index
      %c0_63 = arith.constant 0 : index
      %c0_64 = arith.constant 0 : index
      %97 = vector.load %arg18[%c0_62, %c0_63, %c0_64] : memref<2x8x16xbf16, #tpu.memory_space<vmem>>, vector<2x8x16xbf16>
      tpu.vector_store %arg18[%c0_62, %c0_63, %c0_64], %96 {strides = array<i32>} : memref<2x8x16xbf16, #tpu.memory_space<vmem>>, vector<2x8x16xbf16>,
      %cst_65 = arith.constant 0xFF800000 : f32
      %98 = vector.broadcast %cst_65 : f32 to vector<2x8x1xf32>
      %c0_66 = arith.constant 0 : index
      %c0_67 = arith.constant 0 : index
      %c0_68 = arith.constant 0 : index
      %99 = vector.load %arg19[%c0_66, %c0_67, %c0_68] : memref<2x8x1xf32, #tpu.memory_space<vmem>>, vector<2x8x1xf32>
      tpu.vector_store %arg19[%c0_66, %c0_67, %c0_68], %98 {strides = array<i32>} : memref<2x8x1xf32, #tpu.memory_space<vmem>>, vector<2x8x1xf32>,
      %cst_69 = arith.constant 0.000000e+00 : f32
      %100 = vector.broadcast %cst_69 : f32 to vector<2x8x1xf32>
      %c0_70 = arith.constant 0 : index
      %c0_71 = arith.constant 0 : index
      %c0_72 = arith.constant 0 : index
      %101 = vector.load %arg20[%c0_70, %c0_71, %c0_72] : memref<2x8x1xf32, #tpu.memory_space<vmem>>, vector<2x8x1xf32>
      tpu.vector_store %arg20[%c0_70, %c0_71, %c0_72], %100 {strides = array<i32>} : memref<2x8x1xf32, #tpu.memory_space<vmem>>, vector<2x8x1xf32>,
      %cst_73 = arith.constant 0.000000e+00 : f32
      %102 = vector.broadcast %cst_73 : f32 to vector<2x8x16xf32>
      %c0_74 = arith.constant 0 : index
      %c0_75 = arith.constant 0 : index
      %c0_76 = arith.constant 0 : index
      %103 = vector.load %arg21[%c0_74, %c0_75, %c0_76] : memref<2x8x16xf32, #tpu.memory_space<vmem>>, vector<2x8x16xf32>
      tpu.vector_store %arg21[%c0_74, %c0_75, %c0_76], %102 {strides = array<i32>} : memref<2x8x16xf32, #tpu.memory_space<vmem>>, vector<2x8x16xf32>,
    } else {
    }
    %c0 = arith.constant 0 : index
    %c0_1 = arith.constant 0 : index
    %c0_2 = arith.constant 0 : index
    %3 = vector.load %arg4[%c0, %c0_1, %c0_2] : memref<1x8x32xf32, #tpu.memory_space<vmem>>, vector<1x8x32xf32>
    %4 = vector.shape_cast %3 : vector<1x8x32xf32> to vector<8x32xf32>
    %cst = arith.constant dense<0.000000e+00> : vector<8xf32>
    %5 = vector.multi_reduction <add>, %4, %cst [1] : vector<8x32xf32> to vector<8xf32>
    %6 = vector.shape_cast %5 : vector<8xf32> to vector<8x1xf32>
    %cst_3 = arith.constant 3.200000e+01 : f32
    %7 = vector.broadcast %cst_3 : f32 to vector<8x1xf32>
    %8 = arith.divf %6, %7 : vector<8x1xf32>
    %9 = vector.broadcast %8 : vector<8x1xf32> to vector<8x32xf32>
    %10 = arith.subf %4, %9 : vector<8x32xf32>
    %11 = arith.mulf %10, %10 : vector<8x32xf32>
    %cst_4 = arith.constant dense<0.000000e+00> : vector<8xf32>
    %12 = vector.multi_reduction <add>, %11, %cst_4 [1] : vector<8x32xf32> to vector<8xf32>
    %13 = vector.shape_cast %12 : vector<8xf32> to vector<8x1xf32>
    %cst_5 = arith.constant 3.200000e+01 : f32
    %14 = vector.broadcast %cst_5 : f32 to vector<8x1xf32>
    %15 = arith.divf %13, %14 : vector<8x1xf32>
    %16 = vector.broadcast %8 : vector<8x1xf32> to vector<8x32xf32>
    %17 = arith.subf %4, %16 : vector<8x32xf32>
    %cst_6 = arith.constant 9.99999974E-6 : f32
    %18 = vector.broadcast %cst_6 : f32 to vector<8x1xf32>
    %19 = arith.addf %15, %18 : vector<8x1xf32>
    %20 = math.rsqrt %19 : vector<8x1xf32>
    %21 = vector.broadcast %20 : vector<8x1xf32> to vector<8x32xf32>
    %22 = arith.mulf %17, %21 : vector<8x32xf32>
    %23 = arith.truncf %22 : vector<8x32xf32> to vector<8x32xbf16>
    %24 = vector.shape_cast %23 : vector<8x32xbf16> to vector<1x8x32xbf16>
    %25 = vector.shape_cast %24 : vector<1x8x32xbf16> to vector<1x8x32xbf16>
    %26 = vector.broadcast %25 : vector<1x8x32xbf16> to vector<2x8x32xbf16>
    %c0_7 = arith.constant 0 : index
    %c0_8 = arith.constant 0 : index
    %c0_9 = arith.constant 0 : index
    %27 = vector.load %arg7[%c0_7, %c0_8, %c0_9] : memref<2x32x16xbf16, #tpu.memory_space<vmem>>, vector<2x32x16xbf16>
    "tpu.trace_start"() <{level = 10 : i32, message = "hkc,hcd->hkd"}> : () -> ()
    %cst_10 = arith.constant dense<0.000000e+00> : vector<2x8x16xf32>
    %28 = tpu.matmul %26, %27, %cst_10 {dimension_numbers = #tpu.dot_dimension_numbers<[2], [1], [1], [2], [0, 0, 0, 1, 1, 2], [0], [0]>} : vector<2x8x32xbf16>, vector<2x32x16xbf16>, vector<2x8x16xf32> -> vector<2x8x16xf32>
    "tpu.trace_stop"() : () -> ()
    %c0_11 = arith.constant 0 : index
    %c0_12 = arith.constant 0 : index
    %c0_13 = arith.constant 0 : index
    %29 = vector.load %arg8[%c0_11, %c0_12, %c0_13] : memref<2x1x16xf32, #tpu.memory_space<vmem>>, vector<2x1x16xf32>
    %30 = vector.broadcast %29 : vector<2x1x16xf32> to vector<2x8x16xf32>
    %31 = arith.addf %28, %30 : vector<2x8x16xf32>
    %c0_14 = arith.constant 0 : index
    %c0_15 = arith.constant 0 : index
    %c0_16 = arith.constant 0 : index
    %32 = vector.load %arg9[%c0_14, %c0_15, %c0_16] : memref<2x32x16xbf16, #tpu.memory_space<vmem>>, vector<2x32x16xbf16>
    "tpu.trace_start"() <{level = 10 : i32, message = "hkc,hcd->hkd"}> : () -> ()
    %cst_17 = arith.constant dense<0.000000e+00> : vector<2x8x16xf32>
    %33 = tpu.matmul %26, %32, %cst_17 {dimension_numbers = #tpu.dot_dimension_numbers<[2], [1], [1], [2], [0, 0, 0, 1, 1, 2], [0], [0]>} : vector<2x8x32xbf16>, vector<2x32x16xbf16>, vector<2x8x16xf32> -> vector<2x8x16xf32>
    "tpu.trace_stop"() : () -> ()
    %c0_18 = arith.constant 0 : index
    %c0_19 = arith.constant 0 : index
    %c0_20 = arith.constant 0 : index
    %34 = vector.load %arg10[%c0_18, %c0_19, %c0_20] : memref<2x1x16xf32, #tpu.memory_space<vmem>>, vector<2x1x16xf32>
    %35 = vector.broadcast %34 : vector<2x1x16xf32> to vector<2x8x16xf32>
    %36 = arith.addf %33, %35 : vector<2x8x16xf32>
    %37 = arith.truncf %31 : vector<2x8x16xf32> to vector<2x8x16xbf16>
    %38 = arith.truncf %36 : vector<2x8x16xf32> to vector<2x8x16xbf16>
    %c0_21 = arith.constant 0 : index
    %c0_22 = arith.constant 0 : index
    %c0_23 = arith.constant 0 : index
    %39 = vector.load %arg18[%c0_21, %c0_22, %c0_23] : memref<2x8x16xbf16, #tpu.memory_space<vmem>>, vector<2x8x16xbf16>
    "tpu.trace_start"() <{level = 10 : i32, message = "hqd,hkd->hqk"}> : () -> ()
    %cst_24 = arith.constant dense<0.000000e+00> : vector<2x8x8xf32>
    %40 = tpu.matmul %39, %37, %cst_24 {dimension_numbers = #tpu.dot_dimension_numbers<[2], [2], [1], [1], [0, 0, 0, 1, 1, 1], [0], [0]>} : vector<2x8x16xbf16>, vector<2x8x16xbf16>, vector<2x8x8xf32> -> vector<2x8x8xf32>
    "tpu.trace_stop"() : () -> ()
    %c0_25 = arith.constant 0 : index
    %c0_26 = arith.constant 0 : index
    %c0_27 = arith.constant 0 : index
    %41 = vector.load %arg19[%c0_25, %c0_26, %c0_27] : memref<2x8x1xf32, #tpu.memory_space<vmem>>, vector<2x8x1xf32>
    %cst_28 = arith.constant dense<0xFF800000> : vector<2x8xf32>
    %42 = vector.multi_reduction <maximumf>, %40, %cst_28 [2] : vector<2x8x8xf32> to vector<2x8xf32>
    %43 = vector.shape_cast %42 : vector<2x8xf32> to vector<2x8x1xf32>
    %44 = arith.maximumf %41, %43 : vector<2x8x1xf32>
    %45 = arith.subf %41, %44 : vector<2x8x1xf32>
    %46 = math.exp %45 : vector<2x8x1xf32>
    %47 = vector.broadcast %44 : vector<2x8x1xf32> to vector<2x8x8xf32>
    %48 = arith.subf %40, %47 : vector<2x8x8xf32>
    %49 = math.exp %48 : vector<2x8x8xf32>
    %c0_29 = arith.constant 0 : index
    %c0_30 = arith.constant 0 : index
    %c0_31 = arith.constant 0 : index
    %50 = vector.load %arg20[%c0_29, %c0_30, %c0_31] : memref<2x8x1xf32, #tpu.memory_space<vmem>>, vector<2x8x1xf32>
    %51 = arith.mulf %46, %50 : vector<2x8x1xf32>
    %cst_32 = arith.constant dense<0.000000e+00> : vector<2x8xf32>
    %52 = vector.multi_reduction <add>, %49, %cst_32 [2] : vector<2x8x8xf32> to vector<2x8xf32>
    %53 = vector.shape_cast %52 : vector<2x8xf32> to vector<2x8x1xf32>
    %54 = arith.addf %51, %53 : vector<2x8x1xf32>
    %c0_33 = arith.constant 0 : index
    %c0_34 = arith.constant 0 : index
    %c0_35 = arith.constant 0 : index
    %55 = vector.load %arg20[%c0_33, %c0_34, %c0_35] : memref<2x8x1xf32, #tpu.memory_space<vmem>>, vector<2x8x1xf32>
    tpu.vector_store %arg20[%c0_33, %c0_34, %c0_35], %54 {strides = array<i32>} : memref<2x8x1xf32, #tpu.memory_space<vmem>>, vector<2x8x1xf32>,
    %c0_36 = arith.constant 0 : index
    %c0_37 = arith.constant 0 : index
    %c0_38 = arith.constant 0 : index
    %56 = vector.load %arg21[%c0_36, %c0_37, %c0_38] : memref<2x8x16xf32, #tpu.memory_space<vmem>>, vector<2x8x16xf32>
    %57 = vector.broadcast %46 : vector<2x8x1xf32> to vector<2x8x16xf32>
    %58 = arith.mulf %57, %56 : vector<2x8x16xf32>
    %59 = arith.truncf %49 : vector<2x8x8xf32> to vector<2x8x8xbf16>
    "tpu.trace_start"() <{level = 10 : i32, message = "hqk,hkd->hqd"}> : () -> ()
    %cst_39 = arith.constant dense<0.000000e+00> : vector<2x8x16xf32>
    %60 = tpu.matmul %59, %38, %cst_39 {dimension_numbers = #tpu.dot_dimension_numbers<[2], [1], [1], [2], [0, 0, 0, 1, 1, 2], [0], [0]>} : vector<2x8x8xbf16>, vector<2x8x16xbf16>, vector<2x8x16xf32> -> vector<2x8x16xf32>
    "tpu.trace_stop"() : () -> ()
    %61 = arith.addf %58, %60 : vector<2x8x16xf32>
    %c0_40 = arith.constant 0 : index
    %c0_41 = arith.constant 0 : index
    %c0_42 = arith.constant 0 : index
    %62 = vector.load %arg21[%c0_40, %c0_41, %c0_42] : memref<2x8x16xf32, #tpu.memory_space<vmem>>, vector<2x8x16xf32>
    tpu.vector_store %arg21[%c0_40, %c0_41, %c0_42], %61 {strides = array<i32>} : memref<2x8x16xf32, #tpu.memory_space<vmem>>, vector<2x8x16xf32>,
    %c0_43 = arith.constant 0 : index
    %c0_44 = arith.constant 0 : index
    %c0_45 = arith.constant 0 : index
    %63 = vector.load %arg19[%c0_43, %c0_44, %c0_45] : memref<2x8x1xf32, #tpu.memory_space<vmem>>, vector<2x8x1xf32>
    tpu.vector_store %arg19[%c0_43, %c0_44, %c0_45], %44 {strides = array<i32>} : memref<2x8x1xf32, #tpu.memory_space<vmem>>, vector<2x8x1xf32>,
    %c1_i32 = arith.constant 1 : i32
    %64 = arith.cmpi eq, %arg2, %c1_i32 : i32
    %65 = arith.extui %64 : i1 to i32
    %c0_i32_46 = arith.constant 0 : i32
    %66 = arith.cmpi ne, %65, %c0_i32_46 : i32
    scf.if %66 {
      %c0_47 = arith.constant 0 : index
      %c0_48 = arith.constant 0 : index
      %c0_49 = arith.constant 0 : index
      %67 = vector.load %arg20[%c0_47, %c0_48, %c0_49] : memref<2x8x1xf32, #tpu.memory_space<vmem>>, vector<2x8x1xf32>
      %68 = tpu.reciprocal %67 {approx = true} : vector<2x8x1xf32> -> vector<2x8x1xf32>
      %c0_50 = arith.constant 0 : index
      %c0_51 = arith.constant 0 : index
      %c0_52 = arith.constant 0 : index
      %69 = vector.load %arg21[%c0_50, %c0_51, %c0_52] : memref<2x8x16xf32, #tpu.memory_space<vmem>>, vector<2x8x16xf32>
      %70 = vector.broadcast %68 : vector<2x8x1xf32> to vector<2x8x16xf32>
      %71 = arith.mulf %69, %70 : vector<2x8x16xf32>
      %72 = arith.truncf %71 : vector<2x8x16xf32> to vector<2x8x16xbf16>
      %c0_53 = arith.constant 0 : index
      %c0_54 = arith.constant 0 : index
      %c0_55 = arith.constant 0 : index
      %73 = vector.load %arg11[%c0_53, %c0_54, %c0_55] : memref<2x16x32xbf16, #tpu.memory_space<vmem>>, vector<2x16x32xbf16>
      "tpu.trace_start"() <{level = 10 : i32, message = "hqd,hdc->hqc"}> : () -> ()
      %cst_56 = arith.constant dense<0.000000e+00> : vector<2x8x32xf32>
      %74 = tpu.matmul %72, %73, %cst_56 {dimension_numbers = #tpu.dot_dimension_numbers<[2], [1], [1], [2], [0, 0, 0, 1, 1, 2], [0], [0]>} : vector<2x8x16xbf16>, vector<2x16x32xbf16>, vector<2x8x32xf32> -> vector<2x8x32xf32>
      "tpu.trace_stop"() : () -> ()
      %cst_57 = arith.constant dense<0.000000e+00> : vector<8x32xf32>
      %75 = vector.multi_reduction <add>, %74, %cst_57 [0] : vector<2x8x32xf32> to vector<8x32xf32>
      %c0_58 = arith.constant 0 : index
      %c0_59 = arith.constant 0 : index
      %76 = vector.load %arg12[%c0_58, %c0_59] : memref<1x32xf32, #tpu.memory_space<vmem>>, vector<1x32xf32>
      %77 = vector.shape_cast %76 : vector<1x32xf32> to vector<32xf32>
      %78 = vector.shape_cast %77 : vector<32xf32> to vector<1x32xf32>
      %79 = vector.broadcast %78 : vector<1x32xf32> to vector<8x32xf32>
      %80 = arith.addf %75, %79 : vector<8x32xf32>
      %c0_60 = arith.constant 0 : index
      %c0_61 = arith.constant 0 : index
      %c0_62 = arith.constant 0 : index
      %81 = vector.load %arg3[%c0_60, %c0_61, %c0_62] : memref<1x8x32xf32, #tpu.memory_space<vmem>>, vector<1x8x32xf32>
      %82 = vector.shape_cast %81 : vector<1x8x32xf32> to vector<8x32xf32>
      %83 = arith.addf %82, %80 : vector<8x32xf32>
      %cst_63 = arith.constant dense<0.000000e+00> : vector<8xf32>
      %84 = vector.multi_reduction <add>, %83, %cst_63 [1] : vector<8x32xf32> to vector<8xf32>
      %85 = vector.shape_cast %84 : vector<8xf32> to vector<8x1xf32>
      %cst_64 = arith.constant 3.200000e+01 : f32
      %86 = vector.broadcast %cst_64 : f32 to vector<8x1xf32>
      %87 = arith.divf %85, %86 : vector<8x1xf32>
      %88 = vector.broadcast %87 : vector<8x1xf32> to vector<8x32xf32>
      %89 = arith.subf %83, %88 : vector<8x32xf32>
      %90 = arith.mulf %89, %89 : vector<8x32xf32>
      %cst_65 = arith.constant dense<0.000000e+00> : vector<8xf32>
      %91 = vector.multi_reduction <add>, %90, %cst_65 [1] : vector<8x32xf32> to vector<8xf32>
      %92 = vector.shape_cast %91 : vector<8xf32> to vector<8x1xf32>
      %cst_66 = arith.constant 3.200000e+01 : f32
      %93 = vector.broadcast %cst_66 : f32 to vector<8x1xf32>
      %94 = arith.divf %92, %93 : vector<8x1xf32>
      %95 = vector.broadcast %87 : vector<8x1xf32> to vector<8x32xf32>
      %96 = arith.subf %83, %95 : vector<8x32xf32>
      %cst_67 = arith.constant 9.99999974E-6 : f32
      %97 = vector.broadcast %cst_67 : f32 to vector<8x1xf32>
      %98 = arith.addf %94, %97 : vector<8x1xf32>
      %99 = math.rsqrt %98 : vector<8x1xf32>
      %100 = vector.broadcast %99 : vector<8x1xf32> to vector<8x32xf32>
      %101 = arith.mulf %96, %100 : vector<8x32xf32>
      %102 = arith.truncf %101 : vector<8x32xf32> to vector<8x32xbf16>
      %c0_68 = arith.constant 0 : index
      %c0_69 = arith.constant 0 : index
      %103 = vector.load %arg13[%c0_68, %c0_69] : memref<32x128xbf16, #tpu.memory_space<vmem>>, vector<32x128xbf16>
      %cst_70 = arith.constant dense<0.000000e+00> : vector<8x128xf32>
      %104 = tpu.matmul %102, %103, %cst_70 {dimension_numbers = #tpu.dot_dimension_numbers<[1], [0], [0], [1], [0, 0, 1, 1], [], []>} : vector<8x32xbf16>, vector<32x128xbf16>, vector<8x128xf32> -> vector<8x128xf32>
      %c0_71 = arith.constant 0 : index
      %c0_72 = arith.constant 0 : index
      %105 = vector.load %arg14[%c0_71, %c0_72] : memref<1x128xf32, #tpu.memory_space<vmem>>, vector<1x128xf32>
      %106 = vector.shape_cast %105 : vector<1x128xf32> to vector<128xf32>
      %107 = vector.shape_cast %106 : vector<128xf32> to vector<1x128xf32>
      %108 = vector.broadcast %107 : vector<1x128xf32> to vector<8x128xf32>
      %109 = arith.addf %104, %108 : vector<8x128xf32>
      %cst_73 = arith.constant 5.000000e-01 : f32
      %110 = vector.broadcast %cst_73 : f32 to vector<8x128xf32>
      %111 = arith.mulf %110, %109 : vector<8x128xf32>
      %cst_74 = arith.constant 0.707106769 : f32
      %112 = vector.broadcast %cst_74 : f32 to vector<8x128xf32>
      %113 = arith.mulf %109, %112 : vector<8x128xf32>
      %114 = math.erf %113 : vector<8x128xf32>
      %cst_75 = arith.constant 1.000000e+00 : f32
      %115 = vector.broadcast %cst_75 : f32 to vector<8x128xf32>
      %116 = arith.addf %115, %114 : vector<8x128xf32>
      %117 = arith.mulf %111, %116 : vector<8x128xf32>
      %118 = arith.truncf %117 : vector<8x128xf32> to vector<8x128xbf16>
      %c0_76 = arith.constant 0 : index
      %c0_77 = arith.constant 0 : index
      %119 = vector.load %arg15[%c0_76, %c0_77] : memref<128x32xbf16, #tpu.memory_space<vmem>>, vector<128x32xbf16>
      %cst_78 = arith.constant dense<0.000000e+00> : vector<8x32xf32>
      %120 = tpu.matmul %118, %119, %cst_78 {dimension_numbers = #tpu.dot_dimension_numbers<[1], [0], [0], [1], [0, 0, 1, 1], [], []>} : vector<8x128xbf16>, vector<128x32xbf16>, vector<8x32xf32> -> vector<8x32xf32>
      %c0_79 = arith.constant 0 : index
      %c0_80 = arith.constant 0 : index
      %121 = vector.load %arg16[%c0_79, %c0_80] : memref<1x32xf32, #tpu.memory_space<vmem>>, vector<1x32xf32>
      %122 = vector.shape_cast %121 : vector<1x32xf32> to vector<32xf32>
      %123 = vector.shape_cast %122 : vector<32xf32> to vector<1x32xf32>
      %124 = vector.broadcast %123 : vector<1x32xf32> to vector<8x32xf32>
      %125 = arith.addf %120, %124 : vector<8x32xf32>
      %126 = arith.addf %83, %125 : vector<8x32xf32>
      %c0_81 = arith.constant 0 : index
      %c0_82 = arith.constant 0 : index
      %c0_83 = arith.constant 0 : index
      %127 = vector.load %arg17[%c0_81, %c0_82, %c0_83] : memref<1x8x32xf32, #tpu.memory_space<vmem>>, vector<1x8x32xf32>
      %128 = vector.shape_cast %127 : vector<1x8x32xf32> to vector<8x32xf32>
      %129 = vector.shape_cast %126 : vector<8x32xf32> to vector<1x8x32xf32>
      tpu.vector_store %arg17[%c0_81, %c0_82, %c0_83], %129 {strides = array<i32>} : memref<1x8x32xf32, #tpu.memory_space<vmem>>, vector<1x8x32xf32>,
    } else {
    }
    return
  }
  func.func @transform_0(%arg0: i32, %arg1: i32, %arg2: i32) -> (i32, i32, i32) {
    %c0_i32 = arith.constant 0 : i32
    %c0_i32_0 = arith.constant 0 : i32
    return %arg0, %arg1, %c0_i32 : i32, i32, i32
  }
  func.func @transform_1(%arg0: i32, %arg1: i32, %arg2: i32) -> (i32, i32, i32) {
    %c0_i32 = arith.constant 0 : i32
    %c0_i32_0 = arith.constant 0 : i32
    return %arg0, %arg2, %c0_i32 : i32, i32, i32
  }
  func.func @transform_2(%arg0: i32, %arg1: i32, %arg2: i32) -> (i32, i32, i32) {
    %c0_i32 = arith.constant 0 : i32
    %c0_i32_0 = arith.constant 0 : i32
    %c0_i32_1 = arith.constant 0 : i32
    %c0_i32_2 = arith.constant 0 : i32
    return %c0_i32, %c0_i32_0, %c0_i32_1 : i32, i32, i32
  }
  func.func @transform_3(%arg0: i32, %arg1: i32, %arg2: i32) -> (i32, i32, i32) {
    %c0_i32 = arith.constant 0 : i32
    %c0_i32_0 = arith.constant 0 : i32
    %c0_i32_1 = arith.constant 0 : i32
    %c0_i32_2 = arith.constant 0 : i32
    return %c0_i32, %c0_i32_0, %c0_i32_1 : i32, i32, i32
  }
  func.func @transform_4(%arg0: i32, %arg1: i32, %arg2: i32) -> (i32, i32, i32) {
    %c0_i32 = arith.constant 0 : i32
    %c0_i32_0 = arith.constant 0 : i32
    %c0_i32_1 = arith.constant 0 : i32
    %c0_i32_2 = arith.constant 0 : i32
    return %c0_i32, %c0_i32_0, %c0_i32_1 : i32, i32, i32
  }
  func.func @transform_5(%arg0: i32, %arg1: i32, %arg2: i32) -> (i32, i32, i32) {
    %c0_i32 = arith.constant 0 : i32
    %c0_i32_0 = arith.constant 0 : i32
    %c0_i32_1 = arith.constant 0 : i32
    %c0_i32_2 = arith.constant 0 : i32
    return %c0_i32, %c0_i32_0, %c0_i32_1 : i32, i32, i32
  }
  func.func @transform_6(%arg0: i32, %arg1: i32, %arg2: i32) -> (i32, i32, i32) {
    %c0_i32 = arith.constant 0 : i32
    %c0_i32_0 = arith.constant 0 : i32
    %c0_i32_1 = arith.constant 0 : i32
    %c0_i32_2 = arith.constant 0 : i32
    return %c0_i32, %c0_i32_0, %c0_i32_1 : i32, i32, i32
  }
  func.func @transform_7(%arg0: i32, %arg1: i32, %arg2: i32) -> (i32, i32, i32) {
    %c0_i32 = arith.constant 0 : i32
    %c0_i32_0 = arith.constant 0 : i32
    %c0_i32_1 = arith.constant 0 : i32
    %c0_i32_2 = arith.constant 0 : i32
    return %c0_i32, %c0_i32_0, %c0_i32_1 : i32, i32, i32
  }
  func.func @transform_8(%arg0: i32, %arg1: i32, %arg2: i32) -> (i32, i32, i32) {
    %c0_i32 = arith.constant 0 : i32
    %c0_i32_0 = arith.constant 0 : i32
    %c0_i32_1 = arith.constant 0 : i32
    %c0_i32_2 = arith.constant 0 : i32
    return %c0_i32, %c0_i32_0, %c0_i32_1 : i32, i32, i32
  }
  func.func @transform_9(%arg0: i32, %arg1: i32, %arg2: i32) -> (i32, i32) {
    %c0_i32 = arith.constant 0 : i32
    %c0_i32_0 = arith.constant 0 : i32
    %c0_i32_1 = arith.constant 0 : i32
    return %c0_i32, %c0_i32_0 : i32, i32
  }
  func.func @transform_10(%arg0: i32, %arg1: i32, %arg2: i32) -> (i32, i32) {
    %c0_i32 = arith.constant 0 : i32
    %c0_i32_0 = arith.constant 0 : i32
    %c0_i32_1 = arith.constant 0 : i32
    return %c0_i32, %c0_i32_0 : i32, i32
  }
  func.func @transform_11(%arg0: i32, %arg1: i32, %arg2: i32) -> (i32, i32) {
    %c0_i32 = arith.constant 0 : i32
    %c0_i32_0 = arith.constant 0 : i32
    %c0_i32_1 = arith.constant 0 : i32
    return %c0_i32, %c0_i32_0 : i32, i32
  }
  func.func @transform_12(%arg0: i32, %arg1: i32, %arg2: i32) -> (i32, i32) {
    %c0_i32 = arith.constant 0 : i32
    %c0_i32_0 = arith.constant 0 : i32
    %c0_i32_1 = arith.constant 0 : i32
    return %c0_i32, %c0_i32_0 : i32, i32
  }
  func.func @transform_13(%arg0: i32, %arg1: i32, %arg2: i32) -> (i32, i32) {
    %c0_i32 = arith.constant 0 : i32
    %c0_i32_0 = arith.constant 0 : i32
    %c0_i32_1 = arith.constant 0 : i32
    return %c0_i32, %c0_i32_0 : i32, i32
  }
  func.func @transform_14(%arg0: i32, %arg1: i32, %arg2: i32) -> (i32, i32, i32) {
    %c0_i32 = arith.constant 0 : i32
    %c0_i32_0 = arith.constant 0 : i32
    return %arg0, %arg1, %c0_i32 : i32, i32, i32
  }
}

</mosaic_0001>

<llo_original>
// kernel: tpu_custom_call.1
$region0: #{tpu_custom_call.1}
  #allocation0 [shape = 'u32[]', space=smem, size = 0x4, offset = 0x4, fixed_abs, tag = 'smem constant byte address 0x4 - core index']
  #allocation1 [shape = 'u32[144,128]{1,0:T(1,128)}', space=vmem, size = 0x12000, scoped, tag = 'internal scratch']
  #allocation2 [shape = 'bf16[2,8,16]{2,1,0:T(8,128)(2,1)}', space=vmem, size = 0x1000, scoped, tag = 'scratch operand']
  #allocation3 [shape = 'f32[2,8,1]{2,1,0:T(8,128)}', space=vmem, size = 0x2000, scoped, tag = 'scratch operand']
  #allocation4 [shape = 'f32[2,8,1]{2,1,0:T(8,128)}', space=vmem, size = 0x2000, scoped, tag = 'scratch operand']
  #allocation5 [shape = 'f32[2,8,16]{2,1,0:T(8,128)}', space=vmem, size = 0x2000, scoped, tag = 'scratch operand']
  %s0 = inlined_call_operand.vmem [shape: f32[2,16,32], index: 0, kind: input, shape index: {}]
  %s1 = inlined_call_operand.vmem [shape: f32[2,16,32], index: 1, kind: input, shape index: {}]
  %s2 = inlined_call_operand.vmem [shape: bf16[2,32,16], index: 2, kind: input, shape index: {}]
  %s3 = inlined_call_operand.vmem [shape: f32[2,1,16], index: 3, kind: input, shape index: {}]
  %s4 = inlined_call_operand.vmem [shape: bf16[2,32,16], index: 4, kind: input, shape index: {}]
  %s5 = inlined_call_operand.vmem [shape: f32[2,1,16], index: 5, kind: input, shape index: {}]
  %s6 = inlined_call_operand.vmem [shape: bf16[2,32,16], index: 6, kind: input, shape index: {}]
  %s7 = inlined_call_operand.vmem [shape: f32[2,1,16], index: 7, kind: input, shape index: {}]
  %s8 = inlined_call_operand.vmem [shape: bf16[2,16,32], index: 8, kind: input, shape index: {}]
  %s9 = inlined_call_operand.vmem [shape: f32[1,32], index: 9, kind: input, shape index: {}]
  %s10 = inlined_call_operand.vmem [shape: bf16[32,128], index: 10, kind: input, shape index: {}]
  %s11 = inlined_call_operand.vmem [shape: f32[1,128], index: 11, kind: input, shape index: {}]
  %s12 = inlined_call_operand.vmem [shape: bf16[128,32], index: 12, kind: input, shape index: {}]
  %s13 = inlined_call_operand.vmem [shape: f32[1,32], index: 13, kind: input, shape index: {}]
  %s14 = inlined_call_operand.hbm [shape: f32[2,16,32], index: 14, kind: output, shape index: {}]
  %s15 = sld [smem:[#allocation0]]
  $region97: #{tpu_custom_call.1} parent=0
    _
  %s17 = ssub.s32 1, %s15
  %s18 = scalar_select 0, %s17, %s15
  $region1: #{tpu_custom_call.1} parent=0
    #allocation6 [shape = 'u8[8192]{0}', space=vmem, size = 0x2000, scoped, tag = 'output window, operand 0']
    #allocation7 [shape = 's32[2]{0}', space=sflag, size = 0x8, scoped, tag = 'scoped memory for tpu_custom_call.1']
    %19 = vsyncpa [#allocation7], 0
    %s20 = scalar_lea.sflag [#allocation7], 1
    %21 = vsyncpa %s20, 0
    loop: start=0, step=1, limit=10
    $region2: #{tpu_custom_call.1} parent=1 // loop_pre_header
      _
    $region3: #{tpu_custom_call.1} parent=1 // loop_header
      %s23 = sphi 0, %s27
      %p24 = scmp.ge.s32.totalorder %s23, 10
      %s30 = sphi 0, %s49
      %s31 = sphi 0, %s45
      %s32 = sphi 0, %s41
      %s33 = sphi 0, %s30
      %s34 = sphi 0, %s31
      %s35 = sphi 0, %s32
      %s36 = sphi 0, %s33
      %s37 = sphi 0, %s34
      %s38 = sphi 0, %s35
      %s54 = sphi 0, %s56
      %s57 = sphi 0, %s54
      %s58 = sphi 0, %s57
      %s74 = sphi 0, %s58
      %s82 = sphi 0, %s84
      %s85 = sphi 0, %s82
      %s86 = sphi 0, %s85
      %s102 = sphi 0, %s86
      %s106 = sphi 0, %s106
      %s108 = sphi 0, %s106
      %s109 = sphi 0, %s108
      %s123 = sphi 0, %s109
      %s127 = sphi 0, %s127
      %s129 = sphi 0, %s127
      %s130 = sphi 0, %s129
      %s144 = sphi 0, %s130
      %s148 = sphi 0, %s148
      %s150 = sphi 0, %s148
      %s151 = sphi 0, %s150
      %s165 = sphi 0, %s151
      %s169 = sphi 0, %s169
      %s171 = sphi 0, %s169
      %s172 = sphi 0, %s171
      %s186 = sphi 0, %s172
      %s190 = sphi 0, %s190
      %s192 = sphi 0, %s190
      %s193 = sphi 0, %s192
      %s207 = sphi 0, %s193
      %s211 = sphi 0, %s211
      %s213 = sphi 0, %s211
      %s214 = sphi 0, %s213
      %s228 = sphi 0, %s214
      %s232 = sphi 0, %s232
      %s234 = sphi 0, %s232
      %s235 = sphi 0, %s234
      %s249 = sphi 0, %s235
      %s253 = sphi 0, %s253
      %s255 = sphi 0, %s253
      %s256 = sphi 0, %s255
      %s270 = sphi 0, %s256
      %s274 = sphi 0, %s274
      %s276 = sphi 0, %s274
      %s277 = sphi 0, %s276
      %s291 = sphi 0, %s277
      %s295 = sphi 0, %s295
      %s297 = sphi 0, %s295
      %s298 = sphi 0, %s297
      %s312 = sphi 0, %s298
      %s316 = sphi 0, %s316
      %s318 = sphi 0, %s316
      %s319 = sphi 0, %s318
      %s333 = sphi 0, %s319
      %s337 = sphi 0, %s337
      %s339 = sphi 0, %s337
      %s340 = sphi 0, %s339
      %s354 = sphi 0, %s340
      %s362 = sphi 0, %s364
      %s365 = sphi 0, %s362
      %s366 = sphi 0, %s365
      %s382 = sphi 0, %s366
    $region4: #{tpu_custom_call.1} parent=1 // loop_header_branch
      %26 = sbr.rel (%p24) target = $region8
    $region5: #{tpu_custom_call.1} parent=1 // loop_body
      %s28 = ssub.s32 %s23, 1
      %s29 = ssub.s32 %s23, 2
      %s39 = sadd.s32 1, %s32
      %p40 = scmp.ge.s32.totalorder %s39, 2
      %s41 = scalar_select %p40, 0, %s39
      %s42 = sadd.s32 1, %s31
      %s43 = scalar_select %p40, %s42, %s31
      %p44 = scmp.ge.s32.totalorder %s43, 2
      %s45 = scalar_select %p44, 0, %s43
      %s46 = sadd.s32 1, %s30
      %s47 = scalar_select %p44, %s46, %s30
      %p48 = scmp.ge.s32.totalorder %s47, 2
      %s49 = scalar_select %p48, 0, %s47
      %s50 = ssub.s32 %s30, %s49
      %s51 = ssub.s32 %s31, %s45
      %s52 = sor.u32 %s50, %s51
      %p53 = scmp.eq.s32.totalorder %s52, 0
      %s55 = sadd.s32 %s54, 1
      %s56 = scalar_select %p53, %s54, %s55
      %p59 = pneg %p53
      %p60 = scmp.eq.s32.totalorder %s23, 7
      %p61 = por %p59, %p60
      %p62 = scmp.ne.s32.totalorder %s54, %s57
      %p63 = scmp.eq.s32.totalorder %s23, 0
      %p64 = por %p62, %p63
      %p65 = scmp.ne.s32.totalorder %s54, %s57
      %p66 = scmp.eq.s32.totalorder %s28, 7
      %p67 = por %p65, %p66
      %p68 = scmp.ne.s32.totalorder %s57, %s58
      %p69 = scmp.eq.s32.totalorder %s28, 0
      %p70 = por %p68, %p69
      %p71 = scmp.ne.s32.totalorder %s57, %s58
      %p72 = scmp.eq.s32.totalorder %s29, 7
      %p73 = por %p71, %p72
      %p75 = scmp.ne.s32.totalorder %s58, %s74
      %p76 = scmp.eq.s32.totalorder %s29, 0
      %p77 = por %p75, %p76
      %s78 = ssub.s32 %s30, %s49
      %s79 = ssub.s32 %s32, %s41
      %s80 = sor.u32 %s78, %s79
      %p81 = scmp.eq.s32.totalorder %s80, 0
      %s83 = sadd.s32 %s82, 1
      %s84 = scalar_select %p81, %s82, %s83
      %p87 = pneg %p81
      %p88 = scmp.eq.s32.totalorder %s23, 7
      %p89 = por %p87, %p88
      %p90 = scmp.ne.s32.totalorder %s82, %s85
      %p91 = scmp.eq.s32.totalorder %s23, 0
      %p92 = por %p90, %p91
      %p93 = scmp.ne.s32.totalorder %s82, %s85
      %p94 = scmp.eq.s32.totalorder %s28, 7
      %p95 = por %p93, %p94
      %p96 = scmp.ne.s32.totalorder %s85, %s86
      %p97 = scmp.eq.s32.totalorder %s28, 0
      %p98 = por %p96, %p97
      %p99 = scmp.ne.s32.totalorder %s85, %s86
      %p100 = scmp.eq.s32.totalorder %s29, 7
      %p101 = por %p99, %p100
      %p103 = scmp.ne.s32.totalorder %s86, %s102
      %p104 = scmp.eq.s32.totalorder %s29, 0
      %p105 = por %p103, %p104
      %s107 = sadd.s32 %s106, 1
      %p110 = scmp.eq.s32.totalorder %s23, 7
      %p111 = scmp.ne.s32.totalorder %s106, %s108
      %p112 = scmp.eq.s32.totalorder %s23, 0
      %p113 = por %p111, %p112
      %p114 = scmp.ne.s32.totalorder %s106, %s108
      %p115 = scmp.eq.s32.totalorder %s28, 7
      %p116 = por %p114, %p115
      %p117 = scmp.ne.s32.totalorder %s108, %s109
      %p118 = scmp.eq.s32.totalorder %s28, 0
      %p119 = por %p117, %p118
      %p120 = scmp.ne.s32.totalorder %s108, %s109
      %p121 = scmp.eq.s32.totalorder %s29, 7
      %p122 = por %p120, %p121
      %p124 = scmp.ne.s32.totalorder %s109, %s123
      %p125 = scmp.eq.s32.totalorder %s29, 0
      %p126 = por %p124, %p125
      %s128 = sadd.s32 %s127, 1
      %p131 = scmp.eq.s32.totalorder %s23, 7
      %p132 = scmp.ne.s32.totalorder %s127, %s129
      %p133 = scmp.eq.s32.totalorder %s23, 0
      %p134 = por %p132, %p133
      %p135 = scmp.ne.s32.totalorder %s127, %s129
      %p136 = scmp.eq.s32.totalorder %s28, 7
      %p137 = por %p135, %p136
      %p138 = scmp.ne.s32.totalorder %s129, %s130
      %p139 = scmp.eq.s32.totalorder %s28, 0
      %p140 = por %p138, %p139
      %p141 = scmp.ne.s32.totalorder %s129, %s130
      %p142 = scmp.eq.s32.totalorder %s29, 7
      %p143 = por %p141, %p142
      %p145 = scmp.ne.s32.totalorder %s130, %s144
      %p146 = scmp.eq.s32.totalorder %s29, 0
      %p147 = por %p145, %p146
      %s149 = sadd.s32 %s148, 1
      %p152 = scmp.eq.s32.totalorder %s23, 7
      %p153 = scmp.ne.s32.totalorder %s148, %s150
      %p154 = scmp.eq.s32.totalorder %s23, 0
      %p155 = por %p153, %p154
      %p156 = scmp.ne.s32.totalorder %s148, %s150
      %p157 = scmp.eq.s32.totalorder %s28, 7
      %p158 = por %p156, %p157
      %p159 = scmp.ne.s32.totalorder %s150, %s151
      %p160 = scmp.eq.s32.totalorder %s28, 0
      %p161 = por %p159, %p160
      %p162 = scmp.ne.s32.totalorder %s150, %s151
      %p163 = scmp.eq.s32.totalorder %s29, 7
      %p164 = por %p162, %p163
      %p166 = scmp.ne.s32.totalorder %s151, %s165
      %p167 = scmp.eq.s32.totalorder %s29, 0
      %p168 = por %p166, %p167
      %s170 = sadd.s32 %s169, 1
      %p173 = scmp.eq.s32.totalorder %s23, 7
      %p174 = scmp.ne.s32.totalorder %s169, %s171
      %p175 = scmp.eq.s32.totalorder %s23, 0
      %p176 = por %p174, %p175
      %p177 = scmp.ne.s32.totalorder %s169, %s171
      %p178 = scmp.eq.s32.totalorder %s28, 7
      %p179 = por %p177, %p178
      %p180 = scmp.ne.s32.totalorder %s171, %s172
      %p181 = scmp.eq.s32.totalorder %s28, 0
      %p182 = por %p180, %p181
      %p183 = scmp.ne.s32.totalorder %s171, %s172
      %p184 = scmp.eq.s32.totalorder %s29, 7
      %p185 = por %p183, %p184
      %p187 = scmp.ne.s32.totalorder %s172, %s186
      %p188 = scmp.eq.s32.totalorder %s29, 0
      %p189 = por %p187, %p188
      %s191 = sadd.s32 %s190, 1
      %p194 = scmp.eq.s32.totalorder %s23, 7
      %p195 = scmp.ne.s32.totalorder %s190, %s192
      %p196 = scmp.eq.s32.totalorder %s23, 0
      %p197 = por %p195, %p196
      %p198 = scmp.ne.s32.totalorder %s190, %s192
      %p199 = scmp.eq.s32.totalorder %s28, 7
      %p200 = por %p198, %p199
      %p201 = scmp.ne.s32.totalorder %s192, %s193
      %p202 = scmp.eq.s32.totalorder %s28, 0
      %p203 = por %p201, %p202
      %p204 = scmp.ne.s32.totalorder %s192, %s193
      %p205 = scmp.eq.s32.totalorder %s29, 7
      %p206 = por %p204, %p205
      %p208 = scmp.ne.s32.totalorder %s193, %s207
      %p209 = scmp.eq.s32.totalorder %s29, 0
      %p210 = por %p208, %p209
      %s212 = sadd.s32 %s211, 1
      %p215 = scmp.eq.s32.totalorder %s23, 7
      %p216 = scmp.ne.s32.totalorder %s211, %s213
      %p217 = scmp.eq.s32.totalorder %s23, 0
      %p218 = por %p216, %p217
      %p219 = scmp.ne.s32.totalorder %s211, %s213
      %p220 = scmp.eq.s32.totalorder %s28, 7
      %p221 = por %p219, %p220
      %p222 = scmp.ne.s32.totalorder %s213, %s214
      %p223 = scmp.eq.s32.totalorder %s28, 0
      %p224 = por %p222, %p223
      %p225 = scmp.ne.s32.totalorder %s213, %s214
      %p226 = scmp.eq.s32.totalorder %s29, 7
      %p227 = por %p225, %p226
      %p229 = scmp.ne.s32.totalorder %s214, %s228
      %p230 = scmp.eq.s32.totalorder %s29, 0
      %p231 = por %p229, %p230
      %s233 = sadd.s32 %s232, 1
      %p236 = scmp.eq.s32.totalorder %s23, 7
      %p237 = scmp.ne.s32.totalorder %s232, %s234
      %p238 = scmp.eq.s32.totalorder %s23, 0
      %p239 = por %p237, %p238
      %p240 = scmp.ne.s32.totalorder %s232, %s234
      %p241 = scmp.eq.s32.totalorder %s28, 7
      %p242 = por %p240, %p241
      %p243 = scmp.ne.s32.totalorder %s234, %s235
      %p244 = scmp.eq.s32.totalorder %s28, 0
      %p245 = por %p243, %p244
      %p246 = scmp.ne.s32.totalorder %s234, %s235
      %p247 = scmp.eq.s32.totalorder %s29, 7
      %p248 = por %p246, %p247
      %p250 = scmp.ne.s32.totalorder %s235, %s249
      %p251 = scmp.eq.s32.totalorder %s29, 0
      %p252 = por %p250, %p251
      %s254 = sadd.s32 %s253, 1
      %p257 = scmp.eq.s32.totalorder %s23, 7
      %p258 = scmp.ne.s32.totalorder %s253, %s255
      %p259 = scmp.eq.s32.totalorder %s23, 0
      %p260 = por %p258, %p259
      %p261 = scmp.ne.s32.totalorder %s253, %s255
      %p262 = scmp.eq.s32.totalorder %s28, 7
      %p263 = por %p261, %p262
      %p264 = scmp.ne.s32.totalorder %s255, %s256
      %p265 = scmp.eq.s32.totalorder %s28, 0
      %p266 = por %p264, %p265
      %p267 = scmp.ne.s32.totalorder %s255, %s256
      %p268 = scmp.eq.s32.totalorder %s29, 7
      %p269 = por %p267, %p268
      %p271 = scmp.ne.s32.totalorder %s256, %s270
      %p272 = scmp.eq.s32.totalorder %s29, 0
      %p273 = por %p271, %p272
      %s275 = sadd.s32 %s274, 1
      %p278 = scmp.eq.s32.totalorder %s23, 7
      %p279 = scmp.ne.s32.totalorder %s274, %s276
      %p280 = scmp.eq.s32.totalorder %s23, 0
      %p281 = por %p279, %p280
      %p282 = scmp.ne.s32.totalorder %s274, %s276
      %p283 = scmp.eq.s32.totalorder %s28, 7
      %p284 = por %p282, %p283
      %p285 = scmp.ne.s32.totalorder %s276, %s277
      %p286 = scmp.eq.s32.totalorder %s28, 0
      %p287 = por %p285, %p286
      %p288 = scmp.ne.s32.totalorder %s276, %s277
      %p289 = scmp.eq.s32.totalorder %s29, 7
      %p290 = por %p288, %p289
      %p292 = scmp.ne.s32.totalorder %s277, %s291
      %p293 = scmp.eq.s32.totalorder %s29, 0
      %p294 = por %p292, %p293
      %s296 = sadd.s32 %s295, 1
      %p299 = scmp.eq.s32.totalorder %s23, 7
      %p300 = scmp.ne.s32.totalorder %s295, %s297
      %p301 = scmp.eq.s32.totalorder %s23, 0
      %p302 = por %p300, %p301
      %p303 = scmp.ne.s32.totalorder %s295, %s297
      %p304 = scmp.eq.s32.totalorder %s28, 7
      %p305 = por %p303, %p304
      %p306 = scmp.ne.s32.totalorder %s297, %s298
      %p307 = scmp.eq.s32.totalorder %s28, 0
      %p308 = por %p306, %p307
      %p309 = scmp.ne.s32.totalorder %s297, %s298
      %p310 = scmp.eq.s32.totalorder %s29, 7
      %p311 = por %p309, %p310
      %p313 = scmp.ne.s32.totalorder %s298, %s312
      %p314 = scmp.eq.s32.totalorder %s29, 0
      %p315 = por %p313, %p314
      %s317 = sadd.s32 %s316, 1
      %p320 = scmp.eq.s32.totalorder %s23, 7
      %p321 = scmp.ne.s32.totalorder %s316, %s318
      %p322 = scmp.eq.s32.totalorder %s23, 0
      %p323 = por %p321, %p322
      %p324 = scmp.ne.s32.totalorder %s316, %s318
      %p325 = scmp.eq.s32.totalorder %s28, 7
      %p326 = por %p324, %p325
      %p327 = scmp.ne.s32.totalorder %s318, %s319
      %p328 = scmp.eq.s32.totalorder %s28, 0
      %p329 = por %p327, %p328
      %p330 = scmp.ne.s32.totalorder %s318, %s319
      %p331 = scmp.eq.s32.totalorder %s29, 7
      %p332 = por %p330, %p331
      %p334 = scmp.ne.s32.totalorder %s319, %s333
      %p335 = scmp.eq.s32.totalorder %s29, 0
      %p336 = por %p334, %p335
      %s338 = sadd.s32 %s337, 1
      %p341 = scmp.eq.s32.totalorder %s23, 7
      %p342 = scmp.ne.s32.totalorder %s337, %s339
      %p343 = scmp.eq.s32.totalorder %s23, 0
      %p344 = por %p342, %p343
      %p345 = scmp.ne.s32.totalorder %s337, %s339
      %p346 = scmp.eq.s32.totalorder %s28, 7
      %p347 = por %p345, %p346
      %p348 = scmp.ne.s32.totalorder %s339, %s340
      %p349 = scmp.eq.s32.totalorder %s28, 0
      %p350 = por %p348, %p349
      %p351 = scmp.ne.s32.totalorder %s339, %s340
      %p352 = scmp.eq.s32.totalorder %s29, 7
      %p353 = por %p351, %p352
      %p355 = scmp.ne.s32.totalorder %s340, %s354
      %p356 = scmp.eq.s32.totalorder %s29, 0
      %p357 = por %p355, %p356
      %s358 = ssub.s32 %s30, %s49
      %s359 = ssub.s32 %s31, %s45
      %s360 = sor.u32 %s358, %s359
      %p361 = scmp.eq.s32.totalorder %s360, 0
      %s363 = sadd.s32 %s362, 1
      %s364 = scalar_select %p361, %s362, %s363
      %p367 = pneg %p361
      %p368 = scmp.eq.s32.totalorder %s23, 7
      %p369 = por %p367, %p368
      %p370 = scmp.ne.s32.totalorder %s362, %s365
      %p371 = scmp.eq.s32.totalorder %s23, 0
      %p372 = por %p370, %p371
      %p373 = scmp.ne.s32.totalorder %s362, %s365
      %p374 = scmp.eq.s32.totalorder %s28, 7
      %p375 = por %p373, %p374
      %p376 = scmp.ne.s32.totalorder %s365, %s366
      %p377 = scmp.eq.s32.totalorder %s28, 0
      %p378 = por %p376, %p377
      %p379 = scmp.ne.s32.totalorder %s365, %s366
      %p380 = scmp.eq.s32.totalorder %s29, 7
      %p381 = por %p379, %p380
      %p383 = scmp.ne.s32.totalorder %s366, %s382
      %p384 = scmp.eq.s32.totalorder %s29, 0
      %p385 = por %p383, %p384
      %p386 = scmp.le.s32.totalorder 1, %s23
      %p387 = scmp.lt.s32.totalorder %s23, 9
      %p388 = pnand %p386, %p387
      %p389 = pneg %p388
      // Predicated region
      $region9: #{tpu_custom_call.1} parent=5 // pred_check
        _
      $region10: #{tpu_custom_call.1} parent=5 // pred_check_branch
        %391 = sbr.rel (%p388) target = $region12
      $region11: #{tpu_custom_call.1} parent=5 // pred_region
        %s392 = ssub.s32 %s23, 1
        // Predicated region
        $region13: #{tpu_custom_call.1} parent=11 // pred_check
          %p393 = pneg %p119
        $region14: #{tpu_custom_call.1} parent=11 // pred_check_branch
          %395 = sbr.rel (%p393) target = $region16
        $region15: #{tpu_custom_call.1} parent=11 // pred_region
          _
        $region16: #{tpu_custom_call.1} parent=11 // pred_fallthru
          _
        // Predicated region
        $region17: #{tpu_custom_call.1} parent=11 // pred_check
          %p396 = pneg %p140
        $region18: #{tpu_custom_call.1} parent=11 // pred_check_branch
          %398 = sbr.rel (%p396) target = $region20
        $region19: #{tpu_custom_call.1} parent=11 // pred_region
          _
        $region20: #{tpu_custom_call.1} parent=11 // pred_fallthru
          _
        // Predicated region
        $region21: #{tpu_custom_call.1} parent=11 // pred_check
          %p399 = pneg %p161
        $region22: #{tpu_custom_call.1} parent=11 // pred_check_branch
          %401 = sbr.rel (%p399) target = $region24
        $region23: #{tpu_custom_call.1} parent=11 // pred_region
          _
        $region24: #{tpu_custom_call.1} parent=11 // pred_fallthru
          _
        // Predicated region
        $region25: #{tpu_custom_call.1} parent=11 // pred_check
          %p402 = pneg %p182
        $region26: #{tpu_custom_call.1} parent=11 // pred_check_branch
          %404 = sbr.rel (%p402) target = $region28
        $region27: #{tpu_custom_call.1} parent=11 // pred_region
          _
        $region28: #{tpu_custom_call.1} parent=11 // pred_fallthru
          _
        // Predicated region
        $region29: #{tpu_custom_call.1} parent=11 // pred_check
          %p405 = pneg %p203
        $region30: #{tpu_custom_call.1} parent=11 // pred_check_branch
          %407 = sbr.rel (%p405) target = $region32
        $region31: #{tpu_custom_call.1} parent=11 // pred_region
          _
        $region32: #{tpu_custom_call.1} parent=11 // pred_fallthru
          _
        // Predicated region
        $region33: #{tpu_custom_call.1} parent=11 // pred_check
          %p408 = pneg %p224
        $region34: #{tpu_custom_call.1} parent=11 // pred_check_branch
          %410 = sbr.rel (%p408) target = $region36
        $region35: #{tpu_custom_call.1} parent=11 // pred_region
          _
        $region36: #{tpu_custom_call.1} parent=11 // pred_fallthru
          _
        // Predicated region
        $region37: #{tpu_custom_call.1} parent=11 // pred_check
          %p411 = pneg %p245
        $region38: #{tpu_custom_call.1} parent=11 // pred_check_branch
          %413 = sbr.rel (%p411) target = $region40
        $region39: #{tpu_custom_call.1} parent=11 // pred_region
          _
        $region40: #{tpu_custom_call.1} parent=11 // pred_fallthru
          _
        // Predicated region
        $region41: #{tpu_custom_call.1} parent=11 // pred_check
          %p414 = pneg %p266
        $region42: #{tpu_custom_call.1} parent=11 // pred_check_branch
          %416 = sbr.rel (%p414) target = $region44
        $region43: #{tpu_custom_call.1} parent=11 // pred_region
          _
        $region44: #{tpu_custom_call.1} parent=11 // pred_fallthru
          _
        // Predicated region
        $region45: #{tpu_custom_call.1} parent=11 // pred_check
          %p417 = pneg %p287
        $region46: #{tpu_custom_call.1} parent=11 // pred_check_branch
          %419 = sbr.rel (%p417) target = $region48
        $region47: #{tpu_custom_call.1} parent=11 // pred_region
          _
        $region48: #{tpu_custom_call.1} parent=11 // pred_fallthru
          _
        // Predicated region
        $region49: #{tpu_custom_call.1} parent=11 // pred_check
          %p420 = pneg %p308
        $region50: #{tpu_custom_call.1} parent=11 // pred_check_branch
          %422 = sbr.rel (%p420) target = $region52
        $region51: #{tpu_custom_call.1} parent=11 // pred_region
          _
        $region52: #{tpu_custom_call.1} parent=11 // pred_fallthru
          _
        // Predicated region
        $region53: #{tpu_custom_call.1} parent=11 // pred_check
          %p423 = pneg %p329
        $region54: #{tpu_custom_call.1} parent=11 // pred_check_branch
          %425 = sbr.rel (%p423) target = $region56
        $region55: #{tpu_custom_call.1} parent=11 // pred_region
          _
        $region56: #{tpu_custom_call.1} parent=11 // pred_fallthru
          _
        // Predicated region
        $region57: #{tpu_custom_call.1} parent=11 // pred_check
          %p426 = pneg %p350
        $region58: #{tpu_custom_call.1} parent=11 // pred_check_branch
          %428 = sbr.rel (%p426) target = $region60
        $region59: #{tpu_custom_call.1} parent=11 // pred_region
          _
        $region60: #{tpu_custom_call.1} parent=11 // pred_fallthru
          _
      $region12: #{tpu_custom_call.1} parent=5 // pred_fallthru
        _
      %p429 = scmp.lt.s32.totalorder %s23, 8
      // Predicated region
      $region61: #{tpu_custom_call.1} parent=5 // pred_check
        %p430 = pneg %p429
      $region62: #{tpu_custom_call.1} parent=5 // pred_check_branch
        %432 = sbr.rel (%p430) target = $region64
      $region63: #{tpu_custom_call.1} parent=5 // pred_region
        // Predicated region
        $region65: #{tpu_custom_call.1} parent=63 // pred_check
          %p433 = pneg %p64
        $region66: #{tpu_custom_call.1} parent=63 // pred_check_branch
          %435 = sbr.rel (%p433) target = $region68
        $region67: #{tpu_custom_call.1} parent=63 // pred_region
          %p436 = scmp.lt.s32.totalorder %s30, 1
          %s437 = scalar_select %p436, %s30, 1
          %p438 = scmp.lt.s32.totalorder %s31, 1
          %s439 = scalar_select %p438, %s31, 1
          %s440 = smul.addr %s437, 2
          %s441 = sadd.s32 %s439, %s440
          %s442 = smul.addr %s441, 8
          %s443 = scalar_lea.vmem %s0, %s442
        $region68: #{tpu_custom_call.1} parent=63 // pred_fallthru
          _
        // Predicated region
        $region69: #{tpu_custom_call.1} parent=63 // pred_check
          %p444 = pneg %p92
        $region70: #{tpu_custom_call.1} parent=63 // pred_check_branch
          %446 = sbr.rel (%p444) target = $region72
        $region71: #{tpu_custom_call.1} parent=63 // pred_region
          %p447 = scmp.lt.s32.totalorder %s30, 1
          %s448 = scalar_select %p447, %s30, 1
          %p449 = scmp.lt.s32.totalorder %s32, 1
          %s450 = scalar_select %p449, %s32, 1
          %s451 = smul.addr %s448, 2
          %s452 = sadd.s32 %s450, %s451
          %s453 = smul.addr %s452, 8
          %s454 = scalar_lea.vmem %s1, %s453
        $region72: #{tpu_custom_call.1} parent=63 // pred_fallthru
          _
      $region64: #{tpu_custom_call.1} parent=5 // pred_fallthru
        _
      %p455 = scmp.le.s32.totalorder 1, %s23
      %p456 = scmp.lt.s32.totalorder %s23, 9
      %p457 = pnand %p455, %p456
      %p458 = pneg %p457
      // Predicated region
      $region73: #{tpu_custom_call.1} parent=5 // pred_check
        _
      $region74: #{tpu_custom_call.1} parent=5 // pred_check_branch
        %460 = sbr.rel (%p457) target = $region76
      $region75: #{tpu_custom_call.1} parent=5 // pred_region
        %s461 = ssub.s32 %s23, 1
        %p462 = scmp.lt.s32.totalorder %s33, 1
        %s463 = scalar_select %p462, %s33, 1
        %p464 = scmp.lt.s32.totalorder %s34, 1
        %s465 = scalar_select %p464, %s34, 1
        %s466 = smul.addr %s463, 2
        %s467 = sadd.s32 %s465, %s466
        %s468 = smul.addr %s467, 8
        %s469 = scalar_lea.vmem %s0, %s468
        %p470 = pneg %p70
        %p471 = pneg %p67
        %p472 = scmp.lt.s32.totalorder %s33, 1
        %s473 = scalar_select %p472, %s33, 1
        %p474 = scmp.lt.s32.totalorder %s35, 1
        %s475 = scalar_select %p474, %s35, 1
        %s476 = smul.addr %s473, 2
        %s477 = sadd.s32 %s475, %s476
        %s478 = smul.addr %s477, 8
        %s479 = scalar_lea.vmem %s1, %s478
        %p480 = pneg %p98
        %p481 = pneg %p95
        %p482 = pneg %p119
        %p483 = pneg %p116
        %p484 = pneg %p140
        %p485 = pneg %p137
        %p486 = pneg %p161
        %p487 = pneg %p158
        %p488 = pneg %p182
        %p489 = pneg %p179
        %p490 = pneg %p203
        %p491 = pneg %p200
        %p492 = pneg %p224
        %p493 = pneg %p221
        %p494 = pneg %p245
        %p495 = pneg %p242
        %p496 = pneg %p266
        %p497 = pneg %p263
        %p498 = pneg %p287
        %p499 = pneg %p284
        %p500 = pneg %p308
        %p501 = pneg %p305
        %p502 = pneg %p329
        %p503 = pneg %p326
        %p504 = pneg %p350
        %p505 = pneg %p347
        %p506 = pneg %p378
        %p507 = pneg %p375
        %s508 = sand.u32 %s365, 1
        %s509 = scalar_lea.sflag [#allocation7], %s508
        %s510 = sand.u32 %s365, 1
        %s511 = smul.addr %s510, 8
        %s512 = scalar_lea.vmem [#allocation6], %s511
        %p513 = scmp.lt.s32.totalorder %s33, 1
        %s514 = scalar_select %p513, %s33, 1
        %p515 = scmp.lt.s32.totalorder %s34, 1
        %s516 = scalar_select %p515, %s34, 1
        %s517 = smul.addr %s514, 2
        %s518 = sadd.s32 %s516, %s517
        %s519 = smul.addr %s518, 8
        %s520 = scalar_lea.vmem %s0, %s519
        %p521 = scmp.lt.s32.totalorder %s33, 1
        %s522 = scalar_select %p521, %s33, 1
        %p523 = scmp.lt.s32.totalorder %s35, 1
        %s524 = scalar_select %p523, %s35, 1
        %s525 = smul.addr %s522, 2
        %s526 = sadd.s32 %s524, %s525
        %s527 = smul.addr %s526, 8
        %s528 = scalar_lea.vmem %s1, %s527
        %p530 = scmp.eq.s32.totalorder %s35, 0
        // Predicated region
        $region77: #{tpu_custom_call.1} parent=75 // pred_check
          %p531 = pneg %p530
        $region78: #{tpu_custom_call.1} parent=75 // pred_check_branch
          %533 = sbr.rel (%p531) target = $region80
        $region79: #{tpu_custom_call.1} parent=75 // pred_region
          %v534 = vld [vmem:[%s520] sm:$0xff]
          %vm535 = vcmask 261120
          %v536 = vsel %vm535, %v534, 0.0
          %537 = vadd.xlane.f32.xlu0 %v536
          %v538 = vpop.xlane.xlu0 %537
          %v539 = vrcp.pop 32.0
          %v540 = vmul.f32 %v538, %v539
          %v541 = vsub.f32 %v534, %v540
          %v542 = vmul.f32 %v541, %v541
          %v543 = vsel %vm535, %v542, 0.0
          %544 = vadd.xlane.f32.xlu0 %v543
          %v545 = vpop.xlane.xlu0 %544
          %v546 = vmul.f32 %v545, %v539
          %v547 = vadd.f32 %v546, 1e-05
          %v548 = vrsqrt.pop %v547
          %v549 = vmul.f32 %v541, %v548
          %v550 = vpack.c.bf16 %v549, %v549
          %v551 = vld [vmem:[%s2] sm:$0xf]
          %v552 = vld [vmem:[%s2 + $0x4] sm:$0xf]
          %v553 = vld [vmem:[%s2 + $0x8] sm:$0xf]
          %v554 = vld [vmem:[%s2 + $0xc] sm:$0xf]
          %v555 = vld [vmem:[%s2 + $0x10] sm:$0xf]
          %v556 = vld [vmem:[%s2 + $0x14] sm:$0xf]
          %v557 = vld [vmem:[%s2 + $0x18] sm:$0xf]
          %v558 = vld [vmem:[%s2 + $0x1c] sm:$0xf]
          %v559 = vld [vmem:[%s3] sm:$0x1]
          %v560 = vld [vmem:[%s3 + $0x1] sm:$0x1]
          %v563 = vlaneseq
          %v564 = vshrl.u32 %v563, 7
          %v565 = vsub.s32 0, %v564
          %v566 = vrot.slane %v559, %v565
          %v567 = vlaneseq
          %v568 = vshrl.u32 %v567, 7
          %v569 = vsub.s32 0, %v568
          %v570 = vrot.slane %v560, %v569
          %v577 = vunpack.c.l.b16 %v551
          %v578 = vunpack.c.l.b16 %v552
          %v579 = vunpack.c.l.b16 %v553
          %v580 = vunpack.c.l.b16 %v554
          %v581 = vpack.c.b16 %v578, %v577
          %v582 = vpack.c.b16 %v580, %v579
          %v586 = vsel %vm535, %v550, 0
          %588 = vmatprep.subr.bf16.mxu0 0
          %589 = vmatpush1.bf16.msra.mxu0 %v581
          %590 = vmatprep.subr.bf16.mxu0 0
          %591 = vmatpush1.bf16.msra.mxu0 %v582
          %592 = vmatprep.subr.bf16.mxu0 0
          %593 = vmatpush1.bf16.msra.mxu0 0
          %594 = vmatprep.subr.bf16.mxu0 0
          %595 = vmatpush1.bf16.msra.mxu0 0
          %596 = vmatprep.subr.bf16.mxu0 0
          %597 = vmatpush1.bf16.msra.mxu0 0
          %598 = vmatprep.subr.bf16.mxu0 0
          %599 = vmatpush1.bf16.msra.mxu0 0
          %600 = vmatprep.subr.bf16.mxu0 0
          %601 = vmatpush1.bf16.msra.mxu0 0
          %602 = vmatprep.subr.bf16.mxu0 0
          %603 = vmatpush1.bf16.msra.mxu0 0
          %604 = vmatprep.subr.bf16.mxu0 0
          %605 = vmatpush1.bf16.msra.mxu0 0
          %606 = vmatprep.subr.bf16.mxu0 0
          %607 = vmatpush1.bf16.msra.mxu0 0
          %608 = vmatprep.subr.bf16.mxu0 0
          %609 = vmatpush1.bf16.msra.mxu0 0
          %610 = vmatprep.subr.bf16.mxu0 0
          %611 = vmatpush1.bf16.msra.mxu0 0
          %612 = vmatprep.subr.bf16.mxu0 0
          %613 = vmatpush1.bf16.msra.mxu0 0
          %614 = vmatprep.subr.bf16.mxu0 0
          %615 = vmatpush1.bf16.msra.mxu0 0
          %616 = vmatprep.subr.bf16.mxu0 0
          %617 = vmatpush1.bf16.msra.mxu0 0
          %618 = vmatprep.subr.bf16.mxu0 0
          %619 = vmatpush1.bf16.msra.mxu0 0
          %620 = vmatprep.mubr.bf16.mxu0 0
          %621 = vmatmul.mubr.bf16.gmra.mrb[0].mxu0 %v586
          %v622 = vpop.f32.mrb[0].mxu0
          %v623 = vadd.f32 %v566, %v622
          %v624 = vpop.f32.mrb[0].mxu0
          %v625 = vpop.f32.mrb[0].mxu0
          %v626 = vpop.f32.mrb[0].mxu0
          %627 = vdwg.mxu0
          %v632 = vunpack.c.l.b16 %v555
          %v633 = vunpack.c.l.b16 %v556
          %v634 = vunpack.c.l.b16 %v557
          %v635 = vunpack.c.l.b16 %v558
          %v636 = vpack.c.b16 %v633, %v632
          %v637 = vpack.c.b16 %v635, %v634
          %640 = vmatprep.subr.bf16.mxu0 0
          %641 = vmatpush1.bf16.msra.mxu0 %v636
          %642 = vmatprep.subr.bf16.mxu0 0
          %643 = vmatpush1.bf16.msra.mxu0 %v637
          %644 = vmatprep.subr.bf16.mxu0 0
          %645 = vmatpush1.bf16.msra.mxu0 0
          %646 = vmatprep.subr.bf16.mxu0 0
          %647 = vmatpush1.bf16.msra.mxu0 0
          %648 = vmatprep.subr.bf16.mxu0 0
          %649 = vmatpush1.bf16.msra.mxu0 0
          %650 = vmatprep.subr.bf16.mxu0 0
          %651 = vmatpush1.bf16.msra.mxu0 0
          %652 = vmatprep.subr.bf16.mxu0 0
          %653 = vmatpush1.bf16.msra.mxu0 0
          %654 = vmatprep.subr.bf16.mxu0 0
          %655 = vmatpush1.bf16.msra.mxu0 0
          %656 = vmatprep.subr.bf16.mxu0 0
          %657 = vmatpush1.bf16.msra.mxu0 0
          %658 = vmatprep.subr.bf16.mxu0 0
          %659 = vmatpush1.bf16.msra.mxu0 0
          %660 = vmatprep.subr.bf16.mxu0 0
          %661 = vmatpush1.bf16.msra.mxu0 0
          %662 = vmatprep.subr.bf16.mxu0 0
          %663 = vmatpush1.bf16.msra.mxu0 0
          %664 = vmatprep.subr.bf16.mxu0 0
          %665 = vmatpush1.bf16.msra.mxu0 0
          %666 = vmatprep.subr.bf16.mxu0 0
          %667 = vmatpush1.bf16.msra.mxu0 0
          %668 = vmatprep.subr.bf16.mxu0 0
          %669 = vmatpush1.bf16.msra.mxu0 0
          %670 = vmatprep.subr.bf16.mxu0 0
          %671 = vmatpush1.bf16.msra.mxu0 0
          %672 = vmatprep.mubr.bf16.mxu0 0
          %673 = vmatmul.mubr.bf16.gmra.mrb[0].mxu0 %v586
          %v674 = vpop.f32.mrb[0].mxu0
          %v675 = vadd.f32 %v570, %v674
          %v676 = vpop.f32.mrb[0].mxu0
          %v677 = vpop.f32.mrb[0].mxu0
          %v678 = vpop.f32.mrb[0].mxu0
          %679 = vdwg.mxu0
          %v680 = vpack.c.bf16 %v623, %v623
          %v681 = vpack.c.bf16 %v675, %v675
          %vm682 = vcmask 125952
          %683 = vst.msk [vmem:[#allocation2] sm:$0xf] %vm682, %v680
          %684 = vst.msk [vmem:[#allocation2 + $0x4] sm:$0xf] %vm682, %v681
          %vm685 = vcmask 7168
          %686 = vst.msk [vmem:[#allocation3] sm:$0xff] %vm685, -inf
          %687 = vst.msk [vmem:[#allocation3 + $0x8] sm:$0xff] %vm685, -inf
          %688 = vst.msk [vmem:[#allocation4] sm:$0xff] %vm685, 0.0
          %689 = vst.msk [vmem:[#allocation4 + $0x8] sm:$0xff] %vm685, 0.0
          %vm690 = vcmask 130048
          %691 = vst.msk [vmem:[#allocation5] sm:$0xff] %vm690, 0.0
          %692 = vst.msk [vmem:[#allocation5 + $0x8] sm:$0xff] %vm690, 0.0
        $region80: #{tpu_custom_call.1} parent=75 // pred_fallthru
          _
        %v693 = vld [vmem:[%s528] sm:$0xff]
        %vm694 = vcmask 261120
        %v695 = vsel %vm694, %v693, 0.0
        %696 = vadd.xlane.f32.xlu0 %v695
        %v697 = vpop.xlane.xlu0 %696
        %v698 = vrcp.pop 32.0
        %v699 = vmul.f32 %v697, %v698
        %v700 = vsub.f32 %v693, %v699
        %v701 = vmul.f32 %v700, %v700
        %v702 = vsel %vm694, %v701, 0.0
        %703 = vadd.xlane.f32.xlu0 %v702
        %v704 = vpop.xlane.xlu0 %703
        %v705 = vmul.f32 %v704, %v698
        %v706 = vadd.f32 %v705, 1e-05
        %v707 = vrsqrt.pop %v706
        %v708 = vmul.f32 %v700, %v707
        %v709 = vpack.c.bf16 %v708, %v708
        %v710 = vld [vmem:[%s4] sm:$0xf]
        %v711 = vld [vmem:[%s4 + $0x4] sm:$0xf]
        %v712 = vld [vmem:[%s4 + $0x8] sm:$0xf]
        %v713 = vld [vmem:[%s4 + $0xc] sm:$0xf]
        %v714 = vld [vmem:[%s4 + $0x10] sm:$0xf]
        %v715 = vld [vmem:[%s4 + $0x14] sm:$0xf]
        %v716 = vld [vmem:[%s4 + $0x18] sm:$0xf]
        %v717 = vld [vmem:[%s4 + $0x1c] sm:$0xf]
        %v718 = vld [vmem:[%s5] sm:$0x1]
        %v719 = vld [vmem:[%s5 + $0x1] sm:$0x1]
        %v722 = vlaneseq
        %v723 = vshrl.u32 %v722, 7
        %v724 = vsub.s32 0, %v723
        %v725 = vrot.slane %v718, %v724
        %v726 = vlaneseq
        %v727 = vshrl.u32 %v726, 7
        %v728 = vsub.s32 0, %v727
        %v729 = vrot.slane %v719, %v728
        %v736 = vunpack.c.l.b16 %v710
        %v737 = vunpack.c.l.b16 %v711
        %v738 = vunpack.c.l.b16 %v712
        %v739 = vunpack.c.l.b16 %v713
        %v740 = vpack.c.b16 %v737, %v736
        %v741 = vpack.c.b16 %v739, %v738
        %v745 = vsel %vm694, %v709, 0
        %747 = vmatprep.subr.bf16.mxu0 0
        %748 = vmatpush1.bf16.msra.mxu0 %v740
        %749 = vmatprep.subr.bf16.mxu0 0
        %750 = vmatpush1.bf16.msra.mxu0 %v741
        %751 = vmatprep.subr.bf16.mxu0 0
        %752 = vmatpush1.bf16.msra.mxu0 0
        %753 = vmatprep.subr.bf16.mxu0 0
        %754 = vmatpush1.bf16.msra.mxu0 0
        %755 = vmatprep.subr.bf16.mxu0 0
        %756 = vmatpush1.bf16.msra.mxu0 0
        %757 = vmatprep.subr.bf16.mxu0 0
        %758 = vmatpush1.bf16.msra.mxu0 0
        %759 = vmatprep.subr.bf16.mxu0 0
        %760 = vmatpush1.bf16.msra.mxu0 0
        %761 = vmatprep.subr.bf16.mxu0 0
        %762 = vmatpush1.bf16.msra.mxu0 0
        %763 = vmatprep.subr.bf16.mxu0 0
        %764 = vmatpush1.bf16.msra.mxu0 0
        %765 = vmatprep.subr.bf16.mxu0 0
        %766 = vmatpush1.bf16.msra.mxu0 0
        %767 = vmatprep.subr.bf16.mxu0 0
        %768 = vmatpush1.bf16.msra.mxu0 0
        %769 = vmatprep.subr.bf16.mxu0 0
        %770 = vmatpush1.bf16.msra.mxu0 0
        %771 = vmatprep.subr.bf16.mxu0 0
        %772 = vmatpush1.bf16.msra.mxu0 0
        %773 = vmatprep.subr.bf16.mxu0 0
        %774 = vmatpush1.bf16.msra.mxu0 0
        %775 = vmatprep.subr.bf16.mxu0 0
        %776 = vmatpush1.bf16.msra.mxu0 0
        %777 = vmatprep.subr.bf16.mxu0 0
        %778 = vmatpush1.bf16.msra.mxu0 0
        %779 = vmatprep.mubr.bf16.mxu0 0
        %780 = vmatmul.mubr.bf16.gmra.mrb[0].mxu0 %v745
        %v781 = vpop.f32.mrb[0].mxu0
        %v782 = vadd.f32 %v725, %v781
        %v783 = vpop.f32.mrb[0].mxu0
        %v784 = vpop.f32.mrb[0].mxu0
        %v785 = vpop.f32.mrb[0].mxu0
        %786 = vdwg.mxu0
        %v791 = vunpack.c.l.b16 %v714
        %v792 = vunpack.c.l.b16 %v715
        %v793 = vunpack.c.l.b16 %v716
        %v794 = vunpack.c.l.b16 %v717
        %v795 = vpack.c.b16 %v792, %v791
        %v796 = vpack.c.b16 %v794, %v793
        %799 = vmatprep.subr.bf16.mxu0 0
        %800 = vmatpush1.bf16.msra.mxu0 %v795
        %801 = vmatprep.subr.bf16.mxu0 0
        %802 = vmatpush1.bf16.msra.mxu0 %v796
        %803 = vmatprep.subr.bf16.mxu0 0
        %804 = vmatpush1.bf16.msra.mxu0 0
        %805 = vmatprep.subr.bf16.mxu0 0
        %806 = vmatpush1.bf16.msra.mxu0 0
        %807 = vmatprep.subr.bf16.mxu0 0
        %808 = vmatpush1.bf16.msra.mxu0 0
        %809 = vmatprep.subr.bf16.mxu0 0
        %810 = vmatpush1.bf16.msra.mxu0 0
        %811 = vmatprep.subr.bf16.mxu0 0
        %812 = vmatpush1.bf16.msra.mxu0 0
        %813 = vmatprep.subr.bf16.mxu0 0
        %814 = vmatpush1.bf16.msra.mxu0 0
        %815 = vmatprep.subr.bf16.mxu0 0
        %816 = vmatpush1.bf16.msra.mxu0 0
        %817 = vmatprep.subr.bf16.mxu0 0
        %818 = vmatpush1.bf16.msra.mxu0 0
        %819 = vmatprep.subr.bf16.mxu0 0
        %820 = vmatpush1.bf16.msra.mxu0 0
        %821 = vmatprep.subr.bf16.mxu0 0
        %822 = vmatpush1.bf16.msra.mxu0 0
        %823 = vmatprep.subr.bf16.mxu0 0
        %824 = vmatpush1.bf16.msra.mxu0 0
        %825 = vmatprep.subr.bf16.mxu0 0
        %826 = vmatpush1.bf16.msra.mxu0 0
        %827 = vmatprep.subr.bf16.mxu0 0
        %828 = vmatpush1.bf16.msra.mxu0 0
        %829 = vmatprep.subr.bf16.mxu0 0
        %830 = vmatpush1.bf16.msra.mxu0 0
        %831 = vmatprep.mubr.bf16.mxu0 0
        %832 = vmatmul.mubr.bf16.gmra.mrb[0].mxu0 %v745
        %v833 = vpop.f32.mrb[0].mxu0
        %v834 = vadd.f32 %v729, %v833
        %v835 = vpop.f32.mrb[0].mxu0
        %v836 = vpop.f32.mrb[0].mxu0
        %v837 = vpop.f32.mrb[0].mxu0
        %838 = vdwg.mxu0
        %v839 = vld [vmem:[%s6] sm:$0xf]
        %v840 = vld [vmem:[%s6 + $0x4] sm:$0xf]
        %v841 = vld [vmem:[%s6 + $0x8] sm:$0xf]
        %v842 = vld [vmem:[%s6 + $0xc] sm:$0xf]
        %v843 = vld [vmem:[%s6 + $0x10] sm:$0xf]
        %v844 = vld [vmem:[%s6 + $0x14] sm:$0xf]
        %v845 = vld [vmem:[%s6 + $0x18] sm:$0xf]
        %v846 = vld [vmem:[%s6 + $0x1c] sm:$0xf]
        %v847 = vld [vmem:[%s7] sm:$0x1]
        %v848 = vld [vmem:[%s7 + $0x1] sm:$0x1]
        %v851 = vlaneseq
        %v852 = vshrl.u32 %v851, 7
        %v853 = vsub.s32 0, %v852
        %v854 = vrot.slane %v847, %v853
        %v855 = vlaneseq
        %v856 = vshrl.u32 %v855, 7
        %v857 = vsub.s32 0, %v856
        %v858 = vrot.slane %v848, %v857
        %v865 = vunpack.c.l.b16 %v839
        %v866 = vunpack.c.l.b16 %v840
        %v867 = vunpack.c.l.b16 %v841
        %v868 = vunpack.c.l.b16 %v842
        %v869 = vpack.c.b16 %v866, %v865
        %v870 = vpack.c.b16 %v868, %v867
        %873 = vmatprep.subr.bf16.mxu0 0
        %874 = vmatpush1.bf16.msra.mxu0 %v869
        %875 = vmatprep.subr.bf16.mxu0 0
        %876 = vmatpush1.bf16.msra.mxu0 %v870
        %877 = vmatprep.subr.bf16.mxu0 0
        %878 = vmatpush1.bf16.msra.mxu0 0
        %879 = vmatprep.subr.bf16.mxu0 0
        %880 = vmatpush1.bf16.msra.mxu0 0
        %881 = vmatprep.subr.bf16.mxu0 0
        %882 = vmatpush1.bf16.msra.mxu0 0
        %883 = vmatprep.subr.bf16.mxu0 0
        %884 = vmatpush1.bf16.msra.mxu0 0
        %885 = vmatprep.subr.bf16.mxu0 0
        %886 = vmatpush1.bf16.msra.mxu0 0
        %887 = vmatprep.subr.bf16.mxu0 0
        %888 = vmatpush1.bf16.msra.mxu0 0
        %889 = vmatprep.subr.bf16.mxu0 0
        %890 = vmatpush1.bf16.msra.mxu0 0
        %891 = vmatprep.subr.bf16.mxu0 0
        %892 = vmatpush1.bf16.msra.mxu0 0
        %893 = vmatprep.subr.bf16.mxu0 0
        %894 = vmatpush1.bf16.msra.mxu0 0
        %895 = vmatprep.subr.bf16.mxu0 0
        %896 = vmatpush1.bf16.msra.mxu0 0
        %897 = vmatprep.subr.bf16.mxu0 0
        %898 = vmatpush1.bf16.msra.mxu0 0
        %899 = vmatprep.subr.bf16.mxu0 0
        %900 = vmatpush1.bf16.msra.mxu0 0
        %901 = vmatprep.subr.bf16.mxu0 0
        %902 = vmatpush1.bf16.msra.mxu0 0
        %903 = vmatprep.subr.bf16.mxu0 0
        %904 = vmatpush1.bf16.msra.mxu0 0
        %905 = vmatprep.mubr.bf16.mxu0 0
        %906 = vmatmul.mubr.bf16.gmra.mrb[0].mxu0 %v745
        %v907 = vpop.f32.mrb[0].mxu0
        %v908 = vadd.f32 %v854, %v907
        %v909 = vpop.f32.mrb[0].mxu0
        %v910 = vpop.f32.mrb[0].mxu0
        %v911 = vpop.f32.mrb[0].mxu0
        %912 = vdwg.mxu0
        %v917 = vunpack.c.l.b16 %v843
        %v918 = vunpack.c.l.b16 %v844
        %v919 = vunpack.c.l.b16 %v845
        %v920 = vunpack.c.l.b16 %v846
        %v921 = vpack.c.b16 %v918, %v917
        %v922 = vpack.c.b16 %v920, %v919
        %925 = vmatprep.subr.bf16.mxu0 0
        %926 = vmatpush1.bf16.msra.mxu0 %v921
        %927 = vmatprep.subr.bf16.mxu0 0
        %928 = vmatpush1.bf16.msra.mxu0 %v922
        %929 = vmatprep.subr.bf16.mxu0 0
        %930 = vmatpush1.bf16.msra.mxu0 0
        %931 = vmatprep.subr.bf16.mxu0 0
        %932 = vmatpush1.bf16.msra.mxu0 0
        %933 = vmatprep.subr.bf16.mxu0 0
        %934 = vmatpush1.bf16.msra.mxu0 0
        %935 = vmatprep.subr.bf16.mxu0 0
        %936 = vmatpush1.bf16.msra.mxu0 0
        %937 = vmatprep.subr.bf16.mxu0 0
        %938 = vmatpush1.bf16.msra.mxu0 0
        %939 = vmatprep.subr.bf16.mxu0 0
        %940 = vmatpush1.bf16.msra.mxu0 0
        %941 = vmatprep.subr.bf16.mxu0 0
        %942 = vmatpush1.bf16.msra.mxu0 0
        %943 = vmatprep.subr.bf16.mxu0 0
        %944 = vmatpush1.bf16.msra.mxu0 0
        %945 = vmatprep.subr.bf16.mxu0 0
        %946 = vmatpush1.bf16.msra.mxu0 0
        %947 = vmatprep.subr.bf16.mxu0 0
        %948 = vmatpush1.bf16.msra.mxu0 0
        %949 = vmatprep.subr.bf16.mxu0 0
        %950 = vmatpush1.bf16.msra.mxu0 0
        %951 = vmatprep.subr.bf16.mxu0 0
        %952 = vmatpush1.bf16.msra.mxu0 0
        %953 = vmatprep.subr.bf16.mxu0 0
        %954 = vmatpush1.bf16.msra.mxu0 0
        %955 = vmatprep.subr.bf16.mxu0 0
        %956 = vmatpush1.bf16.msra.mxu0 0
        %957 = vmatprep.mubr.bf16.mxu0 0
        %958 = vmatmul.mubr.bf16.gmra.mrb[0].mxu0 %v745
        %v959 = vpop.f32.mrb[0].mxu0
        %v960 = vadd.f32 %v858, %v959
        %v961 = vpop.f32.mrb[0].mxu0
        %v962 = vpop.f32.mrb[0].mxu0
        %v963 = vpop.f32.mrb[0].mxu0
        %964 = vdwg.mxu0
        %v965 = vpack.c.bf16 %v782, %v782
        %v966 = vpack.c.bf16 %v834, %v834
        %v967 = vpack.c.bf16 %v908, %v908
        %v968 = vpack.c.bf16 %v960, %v960
        %v969 = vld [vmem:[#allocation2] sm:$0xf]
        %v970 = vld [vmem:[#allocation2 + $0x4] sm:$0xf]
        %vm971 = vcmask 130048
        %v973 = vsel %vm971, %v969, 0
        %v976 = vsel %vm971, %v965, 0
        %978 = vmatprep.subr.bf16.mxu0 0
        %979 = vmatpush1.bf16.xpose.msra.mxu0 %v976
        %980 = vmatprep.subr.bf16.mxu0 0
        %981 = vmatpush1.bf16.xpose.msra.mxu0 0
        %982 = vmatprep.subr.bf16.mxu0 0
        %983 = vmatpush1.bf16.xpose.msra.mxu0 0
        %984 = vmatprep.subr.bf16.mxu0 0
        %985 = vmatpush1.bf16.xpose.msra.mxu0 0
        %986 = vmatprep.subr.bf16.mxu0 0
        %987 = vmatpush1.bf16.xpose.msra.mxu0 0
        %988 = vmatprep.subr.bf16.mxu0 0
        %989 = vmatpush1.bf16.xpose.msra.mxu0 0
        %990 = vmatprep.subr.bf16.mxu0 0
        %991 = vmatpush1.bf16.xpose.msra.mxu0 0
        %992 = vmatprep.subr.bf16.mxu0 0
        %993 = vmatpush1.bf16.xpose.msra.mxu0 0
        %994 = vmatprep.subr.bf16.mxu0 0
        %995 = vmatpush1.bf16.xpose.msra.mxu0 0
        %996 = vmatprep.subr.bf16.mxu0 0
        %997 = vmatpush1.bf16.xpose.msra.mxu0 0
        %998 = vmatprep.subr.bf16.mxu0 0
        %999 = vmatpush1.bf16.xpose.msra.mxu0 0
        %1000 = vmatprep.subr.bf16.mxu0 0
        %1001 = vmatpush1.bf16.xpose.msra.mxu0 0
        %1002 = vmatprep.subr.bf16.mxu0 0
        %1003 = vmatpush1.bf16.xpose.msra.mxu0 0
        %1004 = vmatprep.subr.bf16.mxu0 0
        %1005 = vmatpush1.bf16.xpose.msra.mxu0 0
        %1006 = vmatprep.subr.bf16.mxu0 0
        %1007 = vmatpush1.bf16.xpose.msra.mxu0 0
        %1008 = vmatprep.subr.bf16.mxu0 0
        %1009 = vmatpush1.bf16.xpose.msra.mxu0 0
        %1010 = vmatprep.mubr.bf16.mxu0 0
        %1011 = vmatmul.mubr.bf16.gmra.mrb[0].mxu0 %v973
        %v1012 = vpop.f32.mrb[0].mxu0
        %v1013 = vadd.f32 0.0, %v1012
        %v1014 = vpop.f32.mrb[0].mxu0
        %v1015 = vpop.f32.mrb[0].mxu0
        %v1016 = vpop.f32.mrb[0].mxu0
        %1017 = vdwg.mxu0
        %v1019 = vsel %vm971, %v970, 0
        %v1022 = vsel %vm971, %v966, 0
        %1024 = vmatprep.subr.bf16.mxu0 0
        %1025 = vmatpush1.bf16.xpose.msra.mxu0 %v1022
        %1026 = vmatprep.subr.bf16.mxu0 0
        %1027 = vmatpush1.bf16.xpose.msra.mxu0 0
        %1028 = vmatprep.subr.bf16.mxu0 0
        %1029 = vmatpush1.bf16.xpose.msra.mxu0 0
        %1030 = vmatprep.subr.bf16.mxu0 0
        %1031 = vmatpush1.bf16.xpose.msra.mxu0 0
        %1032 = vmatprep.subr.bf16.mxu0 0
        %1033 = vmatpush1.bf16.xpose.msra.mxu0 0
        %1034 = vmatprep.subr.bf16.mxu0 0
        %1035 = vmatpush1.bf16.xpose.msra.mxu0 0
        %1036 = vmatprep.subr.bf16.mxu0 0
        %1037 = vmatpush1.bf16.xpose.msra.mxu0 0
        %1038 = vmatprep.subr.bf16.mxu0 0
        %1039 = vmatpush1.bf16.xpose.msra.mxu0 0
        %1040 = vmatprep.subr.bf16.mxu0 0
        %1041 = vmatpush1.bf16.xpose.msra.mxu0 0
        %1042 = vmatprep.subr.bf16.mxu0 0
        %1043 = vmatpush1.bf16.xpose.msra.mxu0 0
        %1044 = vmatprep.subr.bf16.mxu0 0
        %1045 = vmatpush1.bf16.xpose.msra.mxu0 0
        %1046 = vmatprep.subr.bf16.mxu0 0
        %1047 = vmatpush1.bf16.xpose.msra.mxu0 0
        %1048 = vmatprep.subr.bf16.mxu0 0
        %1049 = vmatpush1.bf16.xpose.msra.mxu0 0
        %1050 = vmatprep.subr.bf16.mxu0 0
        %1051 = vmatpush1.bf16.xpose.msra.mxu0 0
        %1052 = vmatprep.subr.bf16.mxu0 0
        %1053 = vmatpush1.bf16.xpose.msra.mxu0 0
        %1054 = vmatprep.subr.bf16.mxu0 0
        %1055 = vmatpush1.bf16.xpose.msra.mxu0 0
        %1056 = vmatprep.mubr.bf16.mxu0 0
        %1057 = vmatmul.mubr.bf16.gmra.mrb[0].mxu0 %v1019
        %v1058 = vpop.f32.mrb[0].mxu0
        %v1059 = vadd.f32 0.0, %v1058
        %v1060 = vpop.f32.mrb[0].mxu0
        %v1061 = vpop.f32.mrb[0].mxu0
        %v1062 = vpop.f32.mrb[0].mxu0
        %1063 = vdwg.mxu0
        %v1064 = vld [vmem:[#allocation3] sm:$0xff]
        %v1065 = vld [vmem:[#allocation3 + $0x8] sm:$0xff]
        %vm1066 = vcmask 64512
        %v1067 = vsel %vm1066, %v1013, -inf
        %1068 = vmax.xlane.f32.xlu0 %v1067
        %v1069 = vpop.xlane.xlu0 %1068
        %v1070 = vsel %vm1066, %v1059, -inf
        %1071 = vmax.xlane.f32.xlu0 %v1070
        %v1072 = vpop.xlane.xlu0 %1071
        %v1073 = vmax.f32 %v1064, %v1069
        %v1074 = vmax.f32 %v1065, %v1072
        %v1075 = vsub.f32 %v1064, %v1073
        %v1076 = vsub.f32 %v1065, %v1074
        %v1077 = vmul.f32 %v1075, 1.442695
        %v1078 = vpow.pop %v1077
        %v1079 = vmul.f32 %v1076, 1.442695
        %v1080 = vpow.pop %v1079
        %1082 = vset.pattern.permute.xlu0 0
        %1083 = vperm.xlu0 %1082, %v1073
        %v1084 = vpop.permute.xlu0 %1083
        %1087 = vset.pattern.permute.xlu0 0
        %1088 = vperm.xlu0 %1087, %v1074
        %v1089 = vpop.permute.xlu0 %1088
        %v1091 = vsub.f32 %v1013, %v1084
        %v1092 = vsub.f32 %v1059, %v1089
        %v1093 = vmul.f32 %v1091, 1.442695
        %v1094 = vpow.pop %v1093
        %v1095 = vmul.f32 %v1092, 1.442695
        %v1096 = vpow.pop %v1095
        %v1097 = vld [vmem:[#allocation4] sm:$0xff]
        %v1098 = vld [vmem:[#allocation4 + $0x8] sm:$0xff]
        %v1099 = vmul.f32 %v1078, %v1097
        %v1100 = vmul.f32 %v1080, %v1098
        %v1101 = vsel %vm1066, %v1094, 0.0
        %1102 = vadd.xlane.f32.xlu0 %v1101
        %v1103 = vpop.xlane.xlu0 %1102
        %v1104 = vsel %vm1066, %v1096, 0.0
        %1105 = vadd.xlane.f32.xlu0 %v1104
        %v1106 = vpop.xlane.xlu0 %1105
        %v1107 = vadd.f32 %v1099, %v1103
        %v1108 = vadd.f32 %v1100, %v1106
        %vm1109 = vcmask 7168
        %1110 = vst.msk [vmem:[#allocation4] sm:$0xff] %vm1109, %v1107
        %1111 = vst.msk [vmem:[#allocation4 + $0x8] sm:$0xff] %vm1109, %v1108
        %v1112 = vld [vmem:[#allocation5] sm:$0xff]
        %v1113 = vld [vmem:[#allocation5 + $0x8] sm:$0xff]
        %1115 = vset.pattern.permute.xlu0 0
        %1116 = vperm.xlu0 %1115, %v1078
        %v1117 = vpop.permute.xlu0 %1116
        %1120 = vset.pattern.permute.xlu0 0
        %1121 = vperm.xlu0 %1120, %v1080
        %v1122 = vpop.permute.xlu0 %1121
        %v1124 = vmul.f32 %v1117, %v1112
        %v1125 = vmul.f32 %v1122, %v1113
        %v1126 = vpack.c.bf16 %v1094, %v1094
        %v1127 = vpack.c.bf16 %v1096, %v1096
        %v1129 = vsel %vm1066, %v1126, 0
        %vm1131 = vcmask 1043456
        %v1133 = vsel %vm1131, %v967, 0
        %1135 = vmatprep.subr.bf16.mxu0 0
        %1136 = vmatpush1.bf16.msra.mxu0 %v1133
        %1137 = vmatprep.subr.bf16.mxu0 0
        %1138 = vmatpush1.bf16.msra.mxu0 0
        %1139 = vmatprep.subr.bf16.mxu0 0
        %1140 = vmatpush1.bf16.msra.mxu0 0
        %1141 = vmatprep.subr.bf16.mxu0 0
        %1142 = vmatpush1.bf16.msra.mxu0 0
        %1143 = vmatprep.subr.bf16.mxu0 0
        %1144 = vmatpush1.bf16.msra.mxu0 0
        %1145 = vmatprep.subr.bf16.mxu0 0
        %1146 = vmatpush1.bf16.msra.mxu0 0
        %1147 = vmatprep.subr.bf16.mxu0 0
        %1148 = vmatpush1.bf16.msra.mxu0 0
        %1149 = vmatprep.subr.bf16.mxu0 0
        %1150 = vmatpush1.bf16.msra.mxu0 0
        %1151 = vmatprep.subr.bf16.mxu0 0
        %1152 = vmatpush1.bf16.msra.mxu0 0
        %1153 = vmatprep.subr.bf16.mxu0 0
        %1154 = vmatpush1.bf16.msra.mxu0 0
        %1155 = vmatprep.subr.bf16.mxu0 0
        %1156 = vmatpush1.bf16.msra.mxu0 0
        %1157 = vmatprep.subr.bf16.mxu0 0
        %1158 = vmatpush1.bf16.msra.mxu0 0
        %1159 = vmatprep.subr.bf16.mxu0 0
        %1160 = vmatpush1.bf16.msra.mxu0 0
        %1161 = vmatprep.subr.bf16.mxu0 0
        %1162 = vmatpush1.bf16.msra.mxu0 0
        %1163 = vmatprep.subr.bf16.mxu0 0
        %1164 = vmatpush1.bf16.msra.mxu0 0
        %1165 = vmatprep.subr.bf16.mxu0 0
        %1166 = vmatpush1.bf16.msra.mxu0 0
        %1167 = vmatprep.mubr.bf16.mxu0 0
        %1168 = vmatmul.mubr.bf16.gmra.mrb[0].mxu0 %v1129
        %v1169 = vpop.f32.mrb[0].mxu0
        %v1170 = vadd.f32 0.0, %v1169
        %v1171 = vpop.f32.mrb[0].mxu0
        %v1172 = vpop.f32.mrb[0].mxu0
        %v1173 = vpop.f32.mrb[0].mxu0
        %1174 = vdwg.mxu0
        %v1176 = vsel %vm1066, %v1127, 0
        %v1179 = vsel %vm1131, %v968, 0
        %1181 = vmatprep.subr.bf16.mxu0 0
        %1182 = vmatpush1.bf16.msra.mxu0 %v1179
        %1183 = vmatprep.subr.bf16.mxu0 0
        %1184 = vmatpush1.bf16.msra.mxu0 0
        %1185 = vmatprep.subr.bf16.mxu0 0
        %1186 = vmatpush1.bf16.msra.mxu0 0
        %1187 = vmatprep.subr.bf16.mxu0 0
        %1188 = vmatpush1.bf16.msra.mxu0 0
        %1189 = vmatprep.subr.bf16.mxu0 0
        %1190 = vmatpush1.bf16.msra.mxu0 0
        %1191 = vmatprep.subr.bf16.mxu0 0
        %1192 = vmatpush1.bf16.msra.mxu0 0
        %1193 = vmatprep.subr.bf16.mxu0 0
        %1194 = vmatpush1.bf16.msra.mxu0 0
        %1195 = vmatprep.subr.bf16.mxu0 0
        %1196 = vmatpush1.bf16.msra.mxu0 0
        %1197 = vmatprep.subr.bf16.mxu0 0
        %1198 = vmatpush1.bf16.msra.mxu0 0
        %1199 = vmatprep.subr.bf16.mxu0 0
        %1200 = vmatpush1.bf16.msra.mxu0 0
        %1201 = vmatprep.subr.bf16.mxu0 0
        %1202 = vmatpush1.bf16.msra.mxu0 0
        %1203 = vmatprep.subr.bf16.mxu0 0
        %1204 = vmatpush1.bf16.msra.mxu0 0
        %1205 = vmatprep.subr.bf16.mxu0 0
        %1206 = vmatpush1.bf16.msra.mxu0 0
        %1207 = vmatprep.subr.bf16.mxu0 0
        %1208 = vmatpush1.bf16.msra.mxu0 0
        %1209 = vmatprep.subr.bf16.mxu0 0
        %1210 = vmatpush1.bf16.msra.mxu0 0
        %1211 = vmatprep.subr.bf16.mxu0 0
        %1212 = vmatpush1.bf16.msra.mxu0 0
        %1213 = vmatprep.mubr.bf16.mxu0 0
        %1214 = vmatmul.mubr.bf16.gmra.mrb[0].mxu0 %v1176
        %v1215 = vpop.f32.mrb[0].mxu0
        %v1216 = vadd.f32 0.0, %v1215
        %v1217 = vpop.f32.mrb[0].mxu0
        %v1218 = vpop.f32.mrb[0].mxu0
        %v1219 = vpop.f32.mrb[0].mxu0
        %1220 = vdwg.mxu0
        %v1221 = vadd.f32 %v1124, %v1170
        %v1222 = vadd.f32 %v1125, %v1216
        %1223 = vst.msk [vmem:[#allocation5] sm:$0xff] %vm971, %v1221
        %1224 = vst.msk [vmem:[#allocation5 + $0x8] sm:$0xff] %vm971, %v1222
        %1225 = vst.msk [vmem:[#allocation3] sm:$0xff] %vm1109, %v1073
        %1226 = vst.msk [vmem:[#allocation3 + $0x8] sm:$0xff] %vm1109, %v1074
        %p1227 = scmp.eq.s32.totalorder %s35, 1
        // Predicated region
        $region81: #{tpu_custom_call.1} parent=75 // pred_check
          %p1228 = pneg %p1227
        $region82: #{tpu_custom_call.1} parent=75 // pred_check_branch
          %1230 = sbr.rel (%p1228) target = $region84
        $region83: #{tpu_custom_call.1} parent=75 // pred_region
          %v1231 = vld [vmem:[#allocation4] sm:$0xff]
          %v1232 = vld [vmem:[#allocation4 + $0x8] sm:$0xff]
          %v1233 = vrcp.pop %v1231
          %v1234 = vrcp.pop %v1232
          %v1235 = vld [vmem:[#allocation5] sm:$0xff]
          %v1236 = vld [vmem:[#allocation5 + $0x8] sm:$0xff]
          %1238 = vset.pattern.permute.xlu0 0
          %1239 = vperm.xlu0 %1238, %v1233
          %v1240 = vpop.permute.xlu0 %1239
          %1243 = vset.pattern.permute.xlu0 0
          %1244 = vperm.xlu0 %1243, %v1234
          %v1245 = vpop.permute.xlu0 %1244
          %v1247 = vmul.f32 %v1235, %v1240
          %v1248 = vmul.f32 %v1236, %v1245
          %v1249 = vpack.c.bf16 %v1247, %v1247
          %v1250 = vpack.c.bf16 %v1248, %v1248
          %v1251 = vld [vmem:[%s8] sm:$0xf]
          %v1252 = vld [vmem:[%s8 + $0x4] sm:$0xf]
          %v1253 = vld [vmem:[%s8 + $0x8] sm:$0xf]
          %v1254 = vld [vmem:[%s8 + $0xc] sm:$0xf]
          %v1257 = vunpack.c.l.b16 %v1251
          %v1258 = vunpack.c.l.b16 %v1252
          %v1259 = vpack.c.b16 %v1258, %v1257
          %v1262 = vsel %vm971, %v1249, 0
          %1264 = vmatprep.subr.bf16.mxu0 0
          %1265 = vmatpush1.bf16.msra.mxu0 %v1259
          %1266 = vmatprep.subr.bf16.mxu0 0
          %1267 = vmatpush1.bf16.msra.mxu0 0
          %1268 = vmatprep.subr.bf16.mxu0 0
          %1269 = vmatpush1.bf16.msra.mxu0 0
          %1270 = vmatprep.subr.bf16.mxu0 0
          %1271 = vmatpush1.bf16.msra.mxu0 0
          %1272 = vmatprep.subr.bf16.mxu0 0
          %1273 = vmatpush1.bf16.msra.mxu0 0
          %1274 = vmatprep.subr.bf16.mxu0 0
          %1275 = vmatpush1.bf16.msra.mxu0 0
          %1276 = vmatprep.subr.bf16.mxu0 0
          %1277 = vmatpush1.bf16.msra.mxu0 0
          %1278 = vmatprep.subr.bf16.mxu0 0
          %1279 = vmatpush1.bf16.msra.mxu0 0
          %1280 = vmatprep.subr.bf16.mxu0 0
          %1281 = vmatpush1.bf16.msra.mxu0 0
          %1282 = vmatprep.subr.bf16.mxu0 0
          %1283 = vmatpush1.bf16.msra.mxu0 0
          %1284 = vmatprep.subr.bf16.mxu0 0
          %1285 = vmatpush1.bf16.msra.mxu0 0
          %1286 = vmatprep.subr.bf16.mxu0 0
          %1287 = vmatpush1.bf16.msra.mxu0 0
          %1288 = vmatprep.subr.bf16.mxu0 0
          %1289 = vmatpush1.bf16.msra.mxu0 0
          %1290 = vmatprep.subr.bf16.mxu0 0
          %1291 = vmatpush1.bf16.msra.mxu0 0
          %1292 = vmatprep.subr.bf16.mxu0 0
          %1293 = vmatpush1.bf16.msra.mxu0 0
          %1294 = vmatprep.subr.bf16.mxu0 0
          %1295 = vmatpush1.bf16.msra.mxu0 0
          %1296 = vmatprep.mubr.bf16.mxu0 0
          %1297 = vmatmul.mubr.bf16.gmra.mrb[0].mxu0 %v1262
          %v1298 = vpop.f32.mrb[0].mxu0
          %v1299 = vadd.f32 0.0, %v1298
          %v1300 = vpop.f32.mrb[0].mxu0
          %v1301 = vpop.f32.mrb[0].mxu0
          %v1302 = vpop.f32.mrb[0].mxu0
          %1303 = vdwg.mxu0
          %v1306 = vunpack.c.l.b16 %v1253
          %v1307 = vunpack.c.l.b16 %v1254
          %v1308 = vpack.c.b16 %v1307, %v1306
          %v1311 = vsel %vm971, %v1250, 0
          %1313 = vmatprep.subr.bf16.mxu0 0
          %1314 = vmatpush1.bf16.msra.mxu0 %v1308
          %1315 = vmatprep.subr.bf16.mxu0 0
          %1316 = vmatpush1.bf16.msra.mxu0 0
          %1317 = vmatprep.subr.bf16.mxu0 0
          %1318 = vmatpush1.bf16.msra.mxu0 0
          %1319 = vmatprep.subr.bf16.mxu0 0
          %1320 = vmatpush1.bf16.msra.mxu0 0
          %1321 = vmatprep.subr.bf16.mxu0 0
          %1322 = vmatpush1.bf16.msra.mxu0 0
          %1323 = vmatprep.subr.bf16.mxu0 0
          %1324 = vmatpush1.bf16.msra.mxu0 0
          %1325 = vmatprep.subr.bf16.mxu0 0
          %1326 = vmatpush1.bf16.msra.mxu0 0
          %1327 = vmatprep.subr.bf16.mxu0 0
          %1328 = vmatpush1.bf16.msra.mxu0 0
          %1329 = vmatprep.subr.bf16.mxu0 0
          %1330 = vmatpush1.bf16.msra.mxu0 0
          %1331 = vmatprep.subr.bf16.mxu0 0
          %1332 = vmatpush1.bf16.msra.mxu0 0
          %1333 = vmatprep.subr.bf16.mxu0 0
          %1334 = vmatpush1.bf16.msra.mxu0 0
          %1335 = vmatprep.subr.bf16.mxu0 0
          %1336 = vmatpush1.bf16.msra.mxu0 0
          %1337 = vmatprep.subr.bf16.mxu0 0
          %1338 = vmatpush1.bf16.msra.mxu0 0
          %1339 = vmatprep.subr.bf16.mxu0 0
          %1340 = vmatpush1.bf16.msra.mxu0 0
          %1341 = vmatprep.subr.bf16.mxu0 0
          %1342 = vmatpush1.bf16.msra.mxu0 0
          %1343 = vmatprep.subr.bf16.mxu0 0
          %1344 = vmatpush1.bf16.msra.mxu0 0
          %1345 = vmatprep.mubr.bf16.mxu0 0
          %1346 = vmatmul.mubr.bf16.gmra.mrb[0].mxu0 %v1311
          %v1347 = vpop.f32.mrb[0].mxu0
          %v1348 = vadd.f32 0.0, %v1347
          %v1349 = vpop.f32.mrb[0].mxu0
          %v1350 = vpop.f32.mrb[0].mxu0
          %v1351 = vpop.f32.mrb[0].mxu0
          %1352 = vdwg.mxu0
          %v1353 = vsel %vm694, %v1299, 0.0
          %v1354 = vsel %vm694, %v1348, 0.0
          %v1355 = vadd.f32 %v1353, %v1354
          %v1356 = vld [vmem:[%s9] sm:$0x1]
          %v1358 = vlaneseq
          %v1359 = vshrl.u32 %v1358, 7
          %v1360 = vsub.s32 0, %v1359
          %v1361 = vrot.slane %v1356, %v1360
          %v1363 = vadd.f32 %v1355, %v1361
          %v1364 = vld [vmem:[%s520] sm:$0xff]
          %v1365 = vadd.f32 %v1364, %v1363
          %v1366 = vsel %vm694, %v1365, 0.0
          %1367 = vadd.xlane.f32.xlu0 %v1366
          %v1368 = vpop.xlane.xlu0 %1367
          %v1369 = vmul.f32 %v1368, %v698
          %v1370 = vsub.f32 %v1365, %v1369
          %v1371 = vmul.f32 %v1370, %v1370
          %v1372 = vsel %vm694, %v1371, 0.0
          %1373 = vadd.xlane.f32.xlu0 %v1372
          %v1374 = vpop.xlane.xlu0 %1373
          %v1375 = vmul.f32 %v1374, %v698
          %v1376 = vadd.f32 %v1375, 1e-05
          %v1377 = vrsqrt.pop %v1376
          %v1378 = vmul.f32 %v1370, %v1377
          %v1379 = vpack.c.bf16 %v1378, %v1378
          %v1380 = vld [vmem:[%s10] sm:$0xf]
          %v1381 = vld [vmem:[%s10 + $0x4] sm:$0xf]
          %v1382 = vld [vmem:[%s10 + $0x8] sm:$0xf]
          %v1383 = vld [vmem:[%s10 + $0xc] sm:$0xf]
          %v1384 = vld [vmem:[%s11] sm:$0x1]
          %v1386 = vlaneseq
          %v1387 = vshrl.u32 %v1386, 7
          %v1388 = vsub.s32 0, %v1387
          %v1389 = vrot.slane %v1384, %v1388
          %v1395 = vunpack.c.l.b16 %v1380
          %v1396 = vunpack.c.l.b16 %v1381
          %v1397 = vunpack.c.l.b16 %v1382
          %v1398 = vunpack.c.l.b16 %v1383
          %v1399 = vpack.c.b16 %v1396, %v1395
          %v1400 = vpack.c.b16 %v1398, %v1397
          %v1404 = vsel %vm694, %v1379, 0
          %1406 = vmatprep.subr.bf16.mxu0 0
          %1407 = vmatpush1.bf16.msra.mxu0 %v1399
          %1408 = vmatprep.subr.bf16.mxu0 0
          %1409 = vmatpush1.bf16.msra.mxu0 %v1400
          %1410 = vmatprep.subr.bf16.mxu0 0
          %1411 = vmatpush1.bf16.msra.mxu0 0
          %1412 = vmatprep.subr.bf16.mxu0 0
          %1413 = vmatpush1.bf16.msra.mxu0 0
          %1414 = vmatprep.subr.bf16.mxu0 0
          %1415 = vmatpush1.bf16.msra.mxu0 0
          %1416 = vmatprep.subr.bf16.mxu0 0
          %1417 = vmatpush1.bf16.msra.mxu0 0
          %1418 = vmatprep.subr.bf16.mxu0 0
          %1419 = vmatpush1.bf16.msra.mxu0 0
          %1420 = vmatprep.subr.bf16.mxu0 0
          %1421 = vmatpush1.bf16.msra.mxu0 0
          %1422 = vmatprep.subr.bf16.mxu0 0
          %1423 = vmatpush1.bf16.msra.mxu0 0
          %1424 = vmatprep.subr.bf16.mxu0 0
          %1425 = vmatpush1.bf16.msra.mxu0 0
          %1426 = vmatprep.subr.bf16.mxu0 0
          %1427 = vmatpush1.bf16.msra.mxu0 0
          %1428 = vmatprep.subr.bf16.mxu0 0
          %1429 = vmatpush1.bf16.msra.mxu0 0
          %1430 = vmatprep.subr.bf16.mxu0 0
          %1431 = vmatpush1.bf16.msra.mxu0 0
          %1432 = vmatprep.subr.bf16.mxu0 0
          %1433 = vmatpush1.bf16.msra.mxu0 0
          %1434 = vmatprep.subr.bf16.mxu0 0
          %1435 = vmatpush1.bf16.msra.mxu0 0
          %1436 = vmatprep.subr.bf16.mxu0 0
          %1437 = vmatpush1.bf16.msra.mxu0 0
          %1438 = vmatprep.mubr.bf16.mxu0 0
          %1439 = vmatmul.mubr.bf16.gmra.mrb[0].mxu0 %v1404
          %v1440 = vpop.f32.mrb[0].mxu0
          %v1441 = vadd.f32 %v1389, %v1440
          %v1442 = vpop.f32.mrb[0].mxu0
          %v1443 = vpop.f32.mrb[0].mxu0
          %v1444 = vpop.f32.mrb[0].mxu0
          %1445 = vdwg.mxu0
          %v1446 = vmul.f32 %v1441, 0.5
          %v1447 = vmul.f32 %v1441, 0.70710677
          %v1448 = verf.f32.pop %v1447
          %v1449 = vadd.f32 %v1448, 1.0
          %v1450 = vmul.f32 %v1446, %v1449
          %v1451 = vpack.c.bf16 %v1450, %v1450
          %v1452 = vld [vmem:[%s12] sm:$0xf]
          %v1453 = vld [vmem:[%s12 + $0x4] sm:$0xf]
          %v1454 = vld [vmem:[%s12 + $0x8] sm:$0xf]
          %v1455 = vld [vmem:[%s12 + $0xc] sm:$0xf]
          %v1456 = vld [vmem:[%s12 + $0x10] sm:$0xf]
          %v1457 = vld [vmem:[%s12 + $0x14] sm:$0xf]
          %v1458 = vld [vmem:[%s12 + $0x18] sm:$0xf]
          %v1459 = vld [vmem:[%s12 + $0x1c] sm:$0xf]
          %v1460 = vld [vmem:[%s12 + $0x20] sm:$0xf]
          %v1461 = vld [vmem:[%s12 + $0x24] sm:$0xf]
          %v1462 = vld [vmem:[%s12 + $0x28] sm:$0xf]
          %v1463 = vld [vmem:[%s12 + $0x2c] sm:$0xf]
          %v1464 = vld [vmem:[%s12 + $0x30] sm:$0xf]
          %v1465 = vld [vmem:[%s12 + $0x34] sm:$0xf]
          %v1466 = vld [vmem:[%s12 + $0x38] sm:$0xf]
          %v1467 = vld [vmem:[%s12 + $0x3c] sm:$0xf]
          %v1468 = vld [vmem:[%s13] sm:$0x1]
          %v1470 = vlaneseq
          %v1471 = vshrl.u32 %v1470, 7
          %v1472 = vsub.s32 0, %v1471
          %v1473 = vrot.slane %v1468, %v1472
          %v1491 = vunpack.c.l.b16 %v1452
          %v1492 = vunpack.c.l.b16 %v1453
          %v1493 = vunpack.c.l.b16 %v1454
          %v1494 = vunpack.c.l.b16 %v1455
          %v1495 = vunpack.c.l.b16 %v1456
          %v1496 = vunpack.c.l.b16 %v1457
          %v1497 = vunpack.c.l.b16 %v1458
          %v1498 = vunpack.c.l.b16 %v1459
          %v1499 = vunpack.c.l.b16 %v1460
          %v1500 = vunpack.c.l.b16 %v1461
          %v1501 = vunpack.c.l.b16 %v1462
          %v1502 = vunpack.c.l.b16 %v1463
          %v1503 = vunpack.c.l.b16 %v1464
          %v1504 = vunpack.c.l.b16 %v1465
          %v1505 = vunpack.c.l.b16 %v1466
          %v1506 = vunpack.c.l.b16 %v1467
          %v1507 = vpack.c.b16 %v1492, %v1491
          %v1508 = vpack.c.b16 %v1494, %v1493
          %v1509 = vpack.c.b16 %v1496, %v1495
          %v1510 = vpack.c.b16 %v1498, %v1497
          %v1511 = vpack.c.b16 %v1500, %v1499
          %v1512 = vpack.c.b16 %v1502, %v1501
          %v1513 = vpack.c.b16 %v1504, %v1503
          %v1514 = vpack.c.b16 %v1506, %v1505
          %1523 = vmatprep.subr.bf16.mxu0 0
          %1524 = vmatpush1.bf16.msra.mxu0 %v1507
          %1525 = vmatprep.subr.bf16.mxu0 0
          %1526 = vmatpush1.bf16.msra.mxu0 %v1508
          %1527 = vmatprep.subr.bf16.mxu0 0
          %1528 = vmatpush1.bf16.msra.mxu0 %v1509
          %1529 = vmatprep.subr.bf16.mxu0 0
          %1530 = vmatpush1.bf16.msra.mxu0 %v1510
          %1531 = vmatprep.subr.bf16.mxu0 0
          %1532 = vmatpush1.bf16.msra.mxu0 %v1511
          %1533 = vmatprep.subr.bf16.mxu0 0
          %1534 = vmatpush1.bf16.msra.mxu0 %v1512
          %1535 = vmatprep.subr.bf16.mxu0 0
          %1536 = vmatpush1.bf16.msra.mxu0 %v1513
          %1537 = vmatprep.subr.bf16.mxu0 0
          %1538 = vmatpush1.bf16.msra.mxu0 %v1514
          %1539 = vmatprep.subr.bf16.mxu0 0
          %1540 = vmatpush1.bf16.msra.mxu0 0
          %1541 = vmatprep.subr.bf16.mxu0 0
          %1542 = vmatpush1.bf16.msra.mxu0 0
          %1543 = vmatprep.subr.bf16.mxu0 0
          %1544 = vmatpush1.bf16.msra.mxu0 0
          %1545 = vmatprep.subr.bf16.mxu0 0
          %1546 = vmatpush1.bf16.msra.mxu0 0
          %1547 = vmatprep.subr.bf16.mxu0 0
          %1548 = vmatpush1.bf16.msra.mxu0 0
          %1549 = vmatprep.subr.bf16.mxu0 0
          %1550 = vmatpush1.bf16.msra.mxu0 0
          %1551 = vmatprep.subr.bf16.mxu0 0
          %1552 = vmatpush1.bf16.msra.mxu0 0
          %1553 = vmatprep.subr.bf16.mxu0 0
          %1554 = vmatpush1.bf16.msra.mxu0 0
          %1555 = vmatprep.mubr.bf16.mxu0 0
          %1556 = vmatmul.mubr.bf16.gmra.mrb[0].mxu0 %v1451
          %v1557 = vpop.f32.mrb[0].mxu0
          %v1558 = vadd.f32 %v1473, %v1557
          %v1559 = vpop.f32.mrb[0].mxu0
          %v1560 = vpop.f32.mrb[0].mxu0
          %v1561 = vpop.f32.mrb[0].mxu0
          %1562 = vdwg.mxu0
          %v1563 = vadd.f32 %v1365, %v1558
          %1564 = vst.msk [vmem:[%s512] sm:$0xff] %vm694, %v1563
        $region84: #{tpu_custom_call.1} parent=75 // pred_fallthru
          _
        %s1565 = sand.u32 %s365, 1
        %s1566 = scalar_lea.sflag [#allocation7], %s1565
        %s1567 = sand.u32 %s365, 1
        %s1568 = smul.addr %s1567, 8
        %s1569 = scalar_lea.vmem [#allocation6], %s1568
        // Predicated region
        $region85: #{tpu_custom_call.1} parent=75 // pred_check
          %p1570 = pneg %p375
        $region86: #{tpu_custom_call.1} parent=75 // pred_check_branch
          %1572 = sbr.rel (%p1570) target = $region88
        $region87: #{tpu_custom_call.1} parent=75 // pred_region
          %s1574 = ssub.s32 128, 128
          %1575 = vsyncadd %s1566, %s1574
          %s1576 = smul.addr %s33, 2
          %s1577 = sadd.s32 %s34, %s1576
          %s1578 = smul.addr %s1577, 128
          %s1579 = scalar_lea.hbm %s14, %s1578
          %s1581 = sshll.u32 %s1569, 4
          %s1582 = int_to_ptr.vmem [resolvable:$true] %s1581
          %1584 = dma.vmem_to_hbm [thread:$0]  %s1582, 128, %s1579, %s1566
        $region88: #{tpu_custom_call.1} parent=75 // pred_fallthru
          _
      $region76: #{tpu_custom_call.1} parent=5 // pred_fallthru
        _
      %p1585 = scmp.le.s32.totalorder 2, %s23
      // Predicated region
      $region89: #{tpu_custom_call.1} parent=5 // pred_check
        %p1586 = pneg %p1585
      $region90: #{tpu_custom_call.1} parent=5 // pred_check_branch
        %1588 = sbr.rel (%p1586) target = $region92
      $region91: #{tpu_custom_call.1} parent=5 // pred_region
        %s1589 = ssub.s32 %s23, 2
        // Predicated region
        $region93: #{tpu_custom_call.1} parent=91 // pred_check
          %p1590 = pneg %p381
        $region94: #{tpu_custom_call.1} parent=91 // pred_check_branch
          %1592 = sbr.rel (%p1590) target = $region96
        $region95: #{tpu_custom_call.1} parent=91 // pred_region
          %s1593 = sand.u32 %s366, 1
          %s1594 = scalar_lea.sflag [#allocation7], %s1593
          %s1595 = sand.u32 %s366, 1
          %s1596 = smul.addr %s1595, 8
          %s1597 = scalar_lea.vmem [#allocation6], %s1596
          %1598 = dma.done %s1594, 128
        $region96: #{tpu_custom_call.1} parent=91 // pred_fallthru
          _
      $region92: #{tpu_custom_call.1} parent=5 // pred_fallthru
        _
    $region6: #{tpu_custom_call.1} parent=1 // loop_footer
      %s27 = sadd.s32 1, %s23
    $region7: #{tpu_custom_call.1} parent=1 // loop_footer_branch
      %22 = sbr.rel target = $region3
    $region8: #{tpu_custom_call.1} parent=1 // loop_exit
      _
    %1599 = vsyncpa [#allocation7], 1
    %s1600 = scalar_lea.sflag [#allocation7], 1
    %1601 = vsyncpa %s1600, 1

</llo_original>
